<compile_context>
chip_gen: v7x
topology: tpu7x:2x2x1
jax: 0.10.0
libtpu: 0.0.40
codegen_flags: <defaults>
</compile_context>

<pallas_src>
import jax
import jax.numpy as jnp
import numpy as np
from jax import lax
from jax.experimental import pallas as pl
from jax.experimental.pallas import tpu as pltpu

EPS = 1e-5
# bf16 MXU operands (native rate on v5e/v6e/v7x); accumulation + all elementwise
# math stays f32, so no bf16 VPU/EUP paths are used (important on v5e).
_MXU_DTYPE = jnp.bfloat16


def _band_weights(w, width):
    """(3, 3, Cin, Cout) HWIO -> (3*W*Cin, W*Cout) stacked block-tridiagonal RHS.

    band[dy][k*Cin + ci, j*Cout + co] = w[dy, k - j + 1, ci, co] for |k - j| <= 1
    and 0 otherwise, so  rows(dy) @ band[dy]  implements the dx sweep of a 3x3
    SAME conv including the width zero-padding.  The three dy blocks are stacked
    along K in dy order to match the kernel's [row-1 | row | row+1] LHS concat.
    """
    kh, kw, cin, cout = w.shape
    k_idx = jnp.arange(width)[:, None]                    # source column k
    j_idx = jnp.arange(width)[None, :]                    # output column j
    dx = k_idx - j_idx + 1                                # (W, W) tap index
    valid = ((dx >= 0) & (dx < kw)).astype(w.dtype)
    blocks = w[:, jnp.clip(dx, 0, kw - 1), :, :]          # (kh, W, W, Cin, Cout)
    blocks = blocks * valid[None, :, :, None, None]
    blocks = blocks.transpose(0, 1, 3, 2, 4)              # (kh, k, ci, j, co)
    return blocks.reshape(kh * width * cin, width * cout)


def _make_kernel(N, H, W, C):
    NH = N * H
    WC = W * C
    inv_cnt = 1.0 / float(N * H * W)

    def kernel(x_ref, bw1_ref, bw2_ref, bn_ref, out_ref):
        x = x_ref[...]                                            # (NH, WC) f32

        # Channel fold / spread selectors built in-register (no HBM operands).
        fold = (lax.broadcasted_iota(jnp.int32, (WC, C), 0) % C ==
                lax.broadcasted_iota(jnp.int32, (WC, C), 1)).astype(jnp.float32)
        spread = (lax.broadcasted_iota(jnp.int32, (C, WC), 0) ==
                  lax.broadcasted_iota(jnp.int32, (C, WC), 1) % C
                  ).astype(jnp.float32)

        # Row masks: zero the rolled rows that cross an image boundary; this is
        # exactly the height zero-padding of the SAME conv.
        row = lax.broadcasted_iota(jnp.int32, (NH, WC), 0)
        top_mask = (row % H) == 0
        bot_mask = (row % H) == (H - 1)
        zeros = jnp.zeros((NH, WC), jnp.float32)

        def conv3x3(h, bw_ref):
            # Single K = 3*W*C MXU matmul; dy shifts done with pltpu.roll (XLU)
            # + masks (VALU), accumulation stays inside the MXU.
            up = jnp.where(top_mask, zeros, pltpu.roll(h, 1, 0))      # row - 1
            dn = jnp.where(bot_mask, zeros, pltpu.roll(h, NH - 1, 0))  # row + 1
            lhs = jnp.concatenate([up, h, dn], axis=1).astype(_MXU_DTYPE)
            return jnp.dot(lhs, bw_ref[...],
                           preferred_element_type=jnp.float32)        # (NH, WC)

        def batchnorm(h, gamma, beta):
            # One-pass training-mode BN: var = E[h^2] - E[h]^2 per channel.
            stats = jnp.concatenate(
                [jnp.sum(h, axis=0, keepdims=True),
                 jnp.sum(h * h, axis=0, keepdims=True)], axis=0)       # (2, WC)
            folded = jnp.dot(stats, fold,
                             preferred_element_type=jnp.float32) * inv_cnt
            mean_c = folded[0:1, :]                                    # (1, C)
            var_c = folded[1:2, :] - mean_c * mean_c
            scale_c = gamma * lax.rsqrt(var_c + EPS)
            shift_c = beta - mean_c * scale_c
            st = jnp.dot(jnp.concatenate([scale_c, shift_c], axis=0), spread,
                         preferred_element_type=jnp.float32)           # (2, WC)
            return h * st[0:1, :] + st[1:2, :]

        g1 = bn_ref[0:1, :]
        be1 = bn_ref[1:2, :]
        g2 = bn_ref[2:3, :]
        be2 = bn_ref[3:4, :]

        # conv1 + BN1 + ReLU
        h = jnp.maximum(batchnorm(conv3x3(x, bw1_ref), g1, be1), 0.0)
        # conv2 + BN2
        h = batchnorm(conv3x3(h, bw2_ref), g2, be2)
        # residual add + ReLU (residual straight from the unpadded input)
        out_ref[...] = jnp.maximum(h + x, 0.0)

    return kernel


@jax.jit
def residual_block_pallas(x_nchw, w1, b1, g1, be1, w2, b2, g2, be2):
    del b1, b2  # conv biases cancel exactly under training-mode BatchNorm
    x = jnp.transpose(x_nchw, (0, 2, 3, 1)).astype(jnp.float32)   # NHWC
    N, H, W, C = x.shape
    WC = W * C
    x_rows = x.reshape(N * H, WC)                                 # lane-dense rows

    # Band weights shipped as bf16: halves the dominant HBM->VMEM payload.
    bw1 = _band_weights(w1.astype(jnp.float32), W).astype(_MXU_DTYPE)  # (3*WC, WC)
    bw2 = _band_weights(w2.astype(jnp.float32), W).astype(_MXU_DTYPE)

    bn_params = jnp.stack([g1, be1, g2, be2]).astype(jnp.float32)      # (4, C)

    vmem = pl.BlockSpec(memory_space=pltpu.MemorySpace.VMEM)
    out_rows = pl.pallas_call(
        _make_kernel(N, H, W, C),
        out_shape=jax.ShapeDtypeStruct((N * H, WC), jnp.float32),
        in_specs=[vmem] * 4,
        out_specs=vmem,
    )(x_rows, bw1, bw2, bn_params)
    # TODO(synk): at real ResNet scales (and for v7x's 64 MiB VMEM / 2 TCs) the
    # band-matrix formulation must be replaced by a channel-contraction
    # ((rows, 9*Cin) x (9*Cin, Cout)) gridded pipeline with a parallel row axis
    # and a two-pass / cross-core BN reduction; unnecessary at these toy shapes.

    out = out_rows.reshape(N, H, W, C)
    return jnp.transpose(out, (0, 3, 1, 2))                       # back to NCHW


def residual_block_reference(x_nchw, w1, b1, g1, be1, w2, b2, g2, be2):
    """Pure-JAX reference (same NHWC/HWIO convention) for validation."""
    x = jnp.transpose(x_nchw, (0, 2, 3, 1)).astype(jnp.float32)
    dn = ("NHWC", "HWIO", "NHWC")

    def bn(h, gamma, beta):
        mean = jnp.mean(h, axis=(0, 1, 2))
        var = jnp.var(h, axis=(0, 1, 2))
        return (h - mean) * lax.rsqrt(var + EPS) * gamma + beta

    h = lax.conv_general_dilated(x, w1, (1, 1), "SAME", dimension_numbers=dn) + b1
    h = jnp.maximum(bn(h, g1, be1), 0.0)
    h = lax.conv_general_dilated(h, w2, (1, 1), "SAME", dimension_numbers=dn) + b2
    h = bn(h, g2, be2)
    out = jnp.maximum(h + x, 0.0)
    return jnp.transpose(out, (0, 3, 1, 2))


if __name__ == "__main__":
    features = 8   # channels (W * C = 128 -> lane-dense slabs)
    N, H, W = 2, 16, 16

    key = jax.random.PRNGKey(0)
    keys = jax.random.split(key, 9)

    x = jax.random.normal(keys[0], (N, features, H, W), jnp.float32)  # NCHW

    # Conv weights stored directly in HWIO layout: (kh, kw, C_in, C_out)
    w1 = jax.random.normal(keys[1], (3, 3, features, features), jnp.float32) * 0.1
    b1 = jax.random.normal(keys[2], (features,), jnp.float32) * 0.1
    w2 = jax.random.normal(keys[3], (3, 3, features, features), jnp.float32) * 0.1
    b2 = jax.random.normal(keys[4], (features,), jnp.float32) * 0.1
    # BatchNorm affine params (non-trivial to exercise the math)
    g1 = 1.0 + 0.1 * jax.random.normal(keys[5], (features,), jnp.float32)
    be1 = 0.1 * jax.random.normal(keys[6], (features,), jnp.float32)
    g2 = 1.0 + 0.1 * jax.random.normal(keys[7], (features,), jnp.float32)
    be2 = 0.1 * jax.random.normal(keys[8], (features,), jnp.float32)

    out = residual_block_pallas(x, w1, b1, g1, be1, w2, b2, g2, be2)
    out = jax.block_until_ready(out)

    ref = residual_block_reference(x, w1, b1, g1, be1, w2, b2, g2, be2)
    # bf16 MXU operands -> loosen the f32 bit-exact tolerance.
    np.testing.assert_allclose(np.asarray(out), np.asarray(ref),
                               rtol=2e-2, atol=2e-2)

    print("KERNEL_OK")
</pallas_src>

<mosaic_0001>
module attributes {stable_mosaic.version = 11 : i64} {
  func.func @kernel(%arg0: memref<32x128xf32, #tpu.memory_space<vmem>>, %arg1: memref<384x128xbf16, #tpu.memory_space<vmem>>, %arg2: memref<384x128xbf16, #tpu.memory_space<vmem>>, %arg3: memref<4x8xf32, #tpu.memory_space<vmem>>, %arg4: memref<32x128xf32, #tpu.memory_space<vmem>>) attributes {dimension_semantics = [], scalar_prefetch = 0 : i64, scratch_operands = 0 : i64, tpu.core_type = #tpu.core_type<tc>} {
    %c0 = arith.constant 0 : index
    %c0_0 = arith.constant 0 : index
    %0 = vector.load %arg0[%c0, %c0_0] : memref<32x128xf32, #tpu.memory_space<vmem>>, vector<32x128xf32>
    %1 = tpu.iota {dimensions = array<i32: 0>} : vector<128x8xi32>
    %c8_i32 = arith.constant 8 : i32
    %c0_i32 = arith.constant 0 : i32
    %2 = arith.cmpi eq, %c8_i32, %c0_i32 : i32
    %c1_i32 = arith.constant 1 : i32
    %3 = arith.select %2, %c1_i32, %c8_i32 : i32
    %4 = vector.broadcast %3 : i32 to vector<128x8xi32>
    %5 = arith.remsi %1, %4 : vector<128x8xi32>
    %c0_i32_1 = arith.constant 0 : i32
    %6 = vector.broadcast %c0_i32_1 : i32 to vector<128x8xi32>
    %7 = arith.cmpi ne, %5, %6 : vector<128x8xi32>
    %c0_i32_2 = arith.constant 0 : i32
    %8 = vector.broadcast %c0_i32_2 : i32 to vector<128x8xi32>
    %9 = arith.cmpi slt, %5, %8 : vector<128x8xi32>
    %c0_i32_3 = arith.constant 0 : i32
    %10 = arith.cmpi slt, %3, %c0_i32_3 : i32
    %11 = vector.broadcast %10 : i1 to vector<128x8xi1>
    %12 = vector.broadcast %11 : vector<128x8xi1> to vector<128x8xi1>
    %13 = arith.xori %9, %12 : vector<128x8xi1>
    %14 = arith.andi %13, %7 : vector<128x8xi1>
    %15 = vector.broadcast %3 : i32 to vector<128x8xi32>
    %16 = arith.addi %5, %15 : vector<128x8xi32>
    %17 = arith.select %14, %16, %5 : vector<128x8xi1>, vector<128x8xi32>
    %18 = tpu.iota {dimensions = array<i32: 1>} : vector<128x8xi32>
    %19 = arith.cmpi eq, %17, %18 : vector<128x8xi32>
    %20 = arith.extui %19 : vector<128x8xi1> to vector<128x8xi32>
    %21 = arith.sitofp %20 : vector<128x8xi32> to vector<128x8xf32>
    %22 = tpu.iota {dimensions = array<i32: 0>} : vector<8x128xi32>
    %23 = tpu.iota {dimensions = array<i32: 1>} : vector<8x128xi32>
    %c8_i32_4 = arith.constant 8 : i32
    %c0_i32_5 = arith.constant 0 : i32
    %24 = arith.cmpi eq, %c8_i32_4, %c0_i32_5 : i32
    %c1_i32_6 = arith.constant 1 : i32
    %25 = arith.select %24, %c1_i32_6, %c8_i32_4 : i32
    %26 = vector.broadcast %25 : i32 to vector<8x128xi32>
    %27 = arith.remsi %23, %26 : vector<8x128xi32>
    %c0_i32_7 = arith.constant 0 : i32
    %28 = vector.broadcast %c0_i32_7 : i32 to vector<8x128xi32>
    %29 = arith.cmpi ne, %27, %28 : vector<8x128xi32>
    %c0_i32_8 = arith.constant 0 : i32
    %30 = vector.broadcast %c0_i32_8 : i32 to vector<8x128xi32>
    %31 = arith.cmpi slt, %27, %30 : vector<8x128xi32>
    %c0_i32_9 = arith.constant 0 : i32
    %32 = arith.cmpi slt, %25, %c0_i32_9 : i32
    %33 = vector.broadcast %32 : i1 to vector<8x128xi1>
    %34 = vector.broadcast %33 : vector<8x128xi1> to vector<8x128xi1>
    %35 = arith.xori %31, %34 : vector<8x128xi1>
    %36 = arith.andi %35, %29 : vector<8x128xi1>
    %37 = vector.broadcast %25 : i32 to vector<8x128xi32>
    %38 = arith.addi %27, %37 : vector<8x128xi32>
    %39 = arith.select %36, %38, %27 : vector<8x128xi1>, vector<8x128xi32>
    %40 = arith.cmpi eq, %22, %39 : vector<8x128xi32>
    %41 = arith.extui %40 : vector<8x128xi1> to vector<8x128xi32>
    %42 = arith.sitofp %41 : vector<8x128xi32> to vector<8x128xf32>
    %43 = tpu.iota {dimensions = array<i32: 0>} : vector<32x128xi32>
    %c16_i32 = arith.constant 16 : i32
    %c0_i32_10 = arith.constant 0 : i32
    %44 = arith.cmpi eq, %c16_i32, %c0_i32_10 : i32
    %c1_i32_11 = arith.constant 1 : i32
    %45 = arith.select %44, %c1_i32_11, %c16_i32 : i32
    %46 = vector.broadcast %45 : i32 to vector<32x128xi32>
    %47 = arith.remsi %43, %46 : vector<32x128xi32>
    %c0_i32_12 = arith.constant 0 : i32
    %48 = vector.broadcast %c0_i32_12 : i32 to vector<32x128xi32>
    %49 = arith.cmpi ne, %47, %48 : vector<32x128xi32>
    %c0_i32_13 = arith.constant 0 : i32
    %50 = vector.broadcast %c0_i32_13 : i32 to vector<32x128xi32>
    %51 = arith.cmpi slt, %47, %50 : vector<32x128xi32>
    %c0_i32_14 = arith.constant 0 : i32
    %52 = arith.cmpi slt, %45, %c0_i32_14 : i32
    %53 = vector.broadcast %52 : i1 to vector<32x128xi1>
    %54 = vector.broadcast %53 : vector<32x128xi1> to vector<32x128xi1>
    %55 = arith.xori %51, %54 : vector<32x128xi1>
    %56 = arith.andi %55, %49 : vector<32x128xi1>
    %57 = vector.broadcast %45 : i32 to vector<32x128xi32>
    %58 = arith.addi %47, %57 : vector<32x128xi32>
    %59 = arith.select %56, %58, %47 : vector<32x128xi1>, vector<32x128xi32>
    %c0_i32_15 = arith.constant 0 : i32
    %60 = vector.broadcast %c0_i32_15 : i32 to vector<32x128xi32>
    %61 = arith.cmpi eq, %59, %60 : vector<32x128xi32>
    %c16_i32_16 = arith.constant 16 : i32
    %c0_i32_17 = arith.constant 0 : i32
    %62 = arith.cmpi eq, %c16_i32_16, %c0_i32_17 : i32
    %c1_i32_18 = arith.constant 1 : i32
    %63 = arith.select %62, %c1_i32_18, %c16_i32_16 : i32
    %64 = vector.broadcast %63 : i32 to vector<32x128xi32>
    %65 = arith.remsi %43, %64 : vector<32x128xi32>
    %c0_i32_19 = arith.constant 0 : i32
    %66 = vector.broadcast %c0_i32_19 : i32 to vector<32x128xi32>
    %67 = arith.cmpi ne, %65, %66 : vector<32x128xi32>
    %c0_i32_20 = arith.constant 0 : i32
    %68 = vector.broadcast %c0_i32_20 : i32 to vector<32x128xi32>
    %69 = arith.cmpi slt, %65, %68 : vector<32x128xi32>
    %c0_i32_21 = arith.constant 0 : i32
    %70 = arith.cmpi slt, %63, %c0_i32_21 : i32
    %71 = vector.broadcast %70 : i1 to vector<32x128xi1>
    %72 = vector.broadcast %71 : vector<32x128xi1> to vector<32x128xi1>
    %73 = arith.xori %69, %72 : vector<32x128xi1>
    %74 = arith.andi %73, %67 : vector<32x128xi1>
    %75 = vector.broadcast %63 : i32 to vector<32x128xi32>
    %76 = arith.addi %65, %75 : vector<32x128xi32>
    %77 = arith.select %74, %76, %65 : vector<32x128xi1>, vector<32x128xi32>
    %c15_i32 = arith.constant 15 : i32
    %78 = vector.broadcast %c15_i32 : i32 to vector<32x128xi32>
    %79 = arith.cmpi eq, %77, %78 : vector<32x128xi32>
    %cst = arith.constant 0.000000e+00 : f32
    %80 = vector.broadcast %cst : f32 to vector<32x128xf32>
    %c0_22 = arith.constant 0 : index
    %c0_23 = arith.constant 0 : index
    %81 = vector.load %arg3[%c0_22, %c0_23] : memref<4x8xf32, #tpu.memory_space<vmem>>, vector<1x8xf32>
    %c1 = arith.constant 1 : index
    %c0_24 = arith.constant 0 : index
    %82 = vector.load %arg3[%c1, %c0_24] : memref<4x8xf32, #tpu.memory_space<vmem>>, vector<1x8xf32>
    %c2 = arith.constant 2 : index
    %c0_25 = arith.constant 0 : index
    %83 = vector.load %arg3[%c2, %c0_25] : memref<4x8xf32, #tpu.memory_space<vmem>>, vector<1x8xf32>
    %c3 = arith.constant 3 : index
    %c0_26 = arith.constant 0 : index
    %84 = vector.load %arg3[%c3, %c0_26] : memref<4x8xf32, #tpu.memory_space<vmem>>, vector<1x8xf32>
    %c1_i32_27 = arith.constant 1 : i32
    %85 = tpu.dynamic_rotate %0 by %c1_i32_27 dim 0 : vector<32x128xf32>, i32 -> vector<32x128xf32>
    %86 = arith.select %61, %80, %85 : vector<32x128xi1>, vector<32x128xf32>
    %c31_i32 = arith.constant 31 : i32
    %87 = tpu.dynamic_rotate %0 by %c31_i32 dim 0 : vector<32x128xf32>, i32 -> vector<32x128xf32>
    %88 = arith.select %79, %80, %87 : vector<32x128xi1>, vector<32x128xf32>
    %89 = tpu.concatenate %86, %0, %88 in 1 : vector<32x128xf32>, vector<32x128xf32>, vector<32x128xf32> -> vector<32x384xf32>
    %90 = arith.truncf %89 : vector<32x384xf32> to vector<32x384xbf16>
    %c0_28 = arith.constant 0 : index
    %c0_29 = arith.constant 0 : index
    %91 = vector.load %arg1[%c0_28, %c0_29] : memref<384x128xbf16, #tpu.memory_space<vmem>>, vector<384x128xbf16>
    %cst_30 = arith.constant dense<0.000000e+00> : vector<32x128xf32>
    %92 = tpu.matmul %90, %91, %cst_30 {dimension_numbers = #tpu.dot_dimension_numbers<[1], [0], [0], [1], [0, 0, 1, 1], [], []>} : vector<32x384xbf16>, vector<384x128xbf16>, vector<32x128xf32> -> vector<32x128xf32>
    %cst_31 = arith.constant dense<0.000000e+00> : vector<128xf32>
    %93 = vector.multi_reduction <add>, %92, %cst_31 [0] : vector<32x128xf32> to vector<128xf32>
    %94 = vector.shape_cast %93 : vector<128xf32> to vector<1x128xf32>
    %95 = arith.mulf %92, %92 : vector<32x128xf32>
    %cst_32 = arith.constant dense<0.000000e+00> : vector<128xf32>
    %96 = vector.multi_reduction <add>, %95, %cst_32 [0] : vector<32x128xf32> to vector<128xf32>
    %97 = vector.shape_cast %96 : vector<128xf32> to vector<1x128xf32>
    %98 = tpu.concatenate %94, %97 in 0 : vector<1x128xf32>, vector<1x128xf32> -> vector<2x128xf32>
    %cst_33 = arith.constant dense<0.000000e+00> : vector<2x8xf32>
    %99 = tpu.matmul %98, %21, %cst_33 {dimension_numbers = #tpu.dot_dimension_numbers<[1], [0], [0], [1], [0, 0, 1, 1], [], []>} : vector<2x128xf32>, vector<128x8xf32>, vector<2x8xf32> -> vector<2x8xf32>
    %cst_34 = arith.constant 0.001953125 : f32
    %100 = vector.broadcast %cst_34 : f32 to vector<2x8xf32>
    %101 = arith.mulf %99, %100 : vector<2x8xf32>
    %102 = vector.extract_strided_slice %101 {offsets = [0, 0], sizes = [1, 8], strides = [1, 1]} : vector<2x8xf32> to vector<1x8xf32>
    %103 = vector.extract_strided_slice %101 {offsets = [1, 0], sizes = [1, 8], strides = [1, 1]} : vector<2x8xf32> to vector<1x8xf32>
    %104 = arith.mulf %102, %102 : vector<1x8xf32>
    %105 = arith.subf %103, %104 : vector<1x8xf32>
    %cst_35 = arith.constant 9.99999974E-6 : f32
    %106 = vector.broadcast %cst_35 : f32 to vector<1x8xf32>
    %107 = arith.addf %105, %106 : vector<1x8xf32>
    %108 = math.rsqrt %107 : vector<1x8xf32>
    %109 = arith.mulf %81, %108 : vector<1x8xf32>
    %110 = arith.mulf %102, %109 : vector<1x8xf32>
    %111 = arith.subf %82, %110 : vector<1x8xf32>
    %112 = tpu.concatenate %109, %111 in 0 : vector<1x8xf32>, vector<1x8xf32> -> vector<2x8xf32>
    %cst_36 = arith.constant dense<0.000000e+00> : vector<2x128xf32>
    %113 = tpu.matmul %112, %42, %cst_36 {dimension_numbers = #tpu.dot_dimension_numbers<[1], [0], [0], [1], [0, 0, 1, 1], [], []>} : vector<2x8xf32>, vector<8x128xf32>, vector<2x128xf32> -> vector<2x128xf32>
    %114 = vector.extract_strided_slice %113 {offsets = [0, 0], sizes = [1, 128], strides = [1, 1]} : vector<2x128xf32> to vector<1x128xf32>
    %115 = vector.broadcast %114 : vector<1x128xf32> to vector<32x128xf32>
    %116 = arith.mulf %92, %115 : vector<32x128xf32>
    %117 = vector.extract_strided_slice %113 {offsets = [1, 0], sizes = [1, 128], strides = [1, 1]} : vector<2x128xf32> to vector<1x128xf32>
    %118 = vector.broadcast %117 : vector<1x128xf32> to vector<32x128xf32>
    %119 = arith.addf %116, %118 : vector<32x128xf32>
    %cst_37 = arith.constant 0.000000e+00 : f32
    %120 = vector.broadcast %cst_37 : f32 to vector<32x128xf32>
    %121 = arith.maximumf %119, %120 : vector<32x128xf32>
    %c1_i32_38 = arith.constant 1 : i32
    %122 = tpu.dynamic_rotate %121 by %c1_i32_38 dim 0 : vector<32x128xf32>, i32 -> vector<32x128xf32>
    %123 = arith.select %61, %80, %122 : vector<32x128xi1>, vector<32x128xf32>
    %c31_i32_39 = arith.constant 31 : i32
    %124 = tpu.dynamic_rotate %121 by %c31_i32_39 dim 0 : vector<32x128xf32>, i32 -> vector<32x128xf32>
    %125 = arith.select %79, %80, %124 : vector<32x128xi1>, vector<32x128xf32>
    %126 = tpu.concatenate %123, %121, %125 in 1 : vector<32x128xf32>, vector<32x128xf32>, vector<32x128xf32> -> vector<32x384xf32>
    %127 = arith.truncf %126 : vector<32x384xf32> to vector<32x384xbf16>
    %c0_40 = arith.constant 0 : index
    %c0_41 = arith.constant 0 : index
    %128 = vector.load %arg2[%c0_40, %c0_41] : memref<384x128xbf16, #tpu.memory_space<vmem>>, vector<384x128xbf16>
    %cst_42 = arith.constant dense<0.000000e+00> : vector<32x128xf32>
    %129 = tpu.matmul %127, %128, %cst_42 {dimension_numbers = #tpu.dot_dimension_numbers<[1], [0], [0], [1], [0, 0, 1, 1], [], []>} : vector<32x384xbf16>, vector<384x128xbf16>, vector<32x128xf32> -> vector<32x128xf32>
    %cst_43 = arith.constant dense<0.000000e+00> : vector<128xf32>
    %130 = vector.multi_reduction <add>, %129, %cst_43 [0] : vector<32x128xf32> to vector<128xf32>
    %131 = vector.shape_cast %130 : vector<128xf32> to vector<1x128xf32>
    %132 = arith.mulf %129, %129 : vector<32x128xf32>
    %cst_44 = arith.constant dense<0.000000e+00> : vector<128xf32>
    %133 = vector.multi_reduction <add>, %132, %cst_44 [0] : vector<32x128xf32> to vector<128xf32>
    %134 = vector.shape_cast %133 : vector<128xf32> to vector<1x128xf32>
    %135 = tpu.concatenate %131, %134 in 0 : vector<1x128xf32>, vector<1x128xf32> -> vector<2x128xf32>
    %cst_45 = arith.constant dense<0.000000e+00> : vector<2x8xf32>
    %136 = tpu.matmul %135, %21, %cst_45 {dimension_numbers = #tpu.dot_dimension_numbers<[1], [0], [0], [1], [0, 0, 1, 1], [], []>} : vector<2x128xf32>, vector<128x8xf32>, vector<2x8xf32> -> vector<2x8xf32>
    %cst_46 = arith.constant 0.001953125 : f32
    %137 = vector.broadcast %cst_46 : f32 to vector<2x8xf32>
    %138 = arith.mulf %136, %137 : vector<2x8xf32>
    %139 = vector.extract_strided_slice %138 {offsets = [0, 0], sizes = [1, 8], strides = [1, 1]} : vector<2x8xf32> to vector<1x8xf32>
    %140 = vector.extract_strided_slice %138 {offsets = [1, 0], sizes = [1, 8], strides = [1, 1]} : vector<2x8xf32> to vector<1x8xf32>
    %141 = arith.mulf %139, %139 : vector<1x8xf32>
    %142 = arith.subf %140, %141 : vector<1x8xf32>
    %cst_47 = arith.constant 9.99999974E-6 : f32
    %143 = vector.broadcast %cst_47 : f32 to vector<1x8xf32>
    %144 = arith.addf %142, %143 : vector<1x8xf32>
    %145 = math.rsqrt %144 : vector<1x8xf32>
    %146 = arith.mulf %83, %145 : vector<1x8xf32>
    %147 = arith.mulf %139, %146 : vector<1x8xf32>
    %148 = arith.subf %84, %147 : vector<1x8xf32>
    %149 = tpu.concatenate %146, %148 in 0 : vector<1x8xf32>, vector<1x8xf32> -> vector<2x8xf32>
    %cst_48 = arith.constant dense<0.000000e+00> : vector<2x128xf32>
    %150 = tpu.matmul %149, %42, %cst_48 {dimension_numbers = #tpu.dot_dimension_numbers<[1], [0], [0], [1], [0, 0, 1, 1], [], []>} : vector<2x8xf32>, vector<8x128xf32>, vector<2x128xf32> -> vector<2x128xf32>
    %151 = vector.extract_strided_slice %150 {offsets = [0, 0], sizes = [1, 128], strides = [1, 1]} : vector<2x128xf32> to vector<1x128xf32>
    %152 = vector.broadcast %151 : vector<1x128xf32> to vector<32x128xf32>
    %153 = arith.mulf %129, %152 : vector<32x128xf32>
    %154 = vector.extract_strided_slice %150 {offsets = [1, 0], sizes = [1, 128], strides = [1, 1]} : vector<2x128xf32> to vector<1x128xf32>
    %155 = vector.broadcast %154 : vector<1x128xf32> to vector<32x128xf32>
    %156 = arith.addf %153, %155 : vector<32x128xf32>
    %157 = arith.addf %156, %0 : vector<32x128xf32>
    %cst_49 = arith.constant 0.000000e+00 : f32
    %158 = vector.broadcast %cst_49 : f32 to vector<32x128xf32>
    %159 = arith.maximumf %157, %158 : vector<32x128xf32>
    %c0_50 = arith.constant 0 : index
    %c0_51 = arith.constant 0 : index
    %160 = vector.load %arg4[%c0_50, %c0_51] : memref<32x128xf32, #tpu.memory_space<vmem>>, vector<32x128xf32>
    tpu.vector_store %arg4[%c0_50, %c0_51], %159 {strides = array<i32>} : memref<32x128xf32, #tpu.memory_space<vmem>>, vector<32x128xf32>,
    return
  }
}

</mosaic_0001>

<llo_original>
// kernel: residual_block_pallas.1
$region0: #{residual_block_pallas.1}
  #allocation0 [shape = 'u32[]', space=smem, size = 0x4, offset = 0x4, fixed_abs, tag = 'smem constant byte address 0x4 - core index']
  #allocation1 [shape = 'u32[144,128]{1,0:T(1,128)}', space=vmem, size = 0x12000, scoped, tag = 'internal scratch']
  %s0 = inlined_call_operand.vmem [shape: f32[32,128], index: 0, kind: input, shape index: {}]
  %s1 = inlined_call_operand.vmem [shape: bf16[384,128], index: 1, kind: input, shape index: {}]
  %s2 = inlined_call_operand.vmem [shape: bf16[384,128], index: 2, kind: input, shape index: {}]
  %s3 = inlined_call_operand.vmem [shape: f32[4,8], index: 3, kind: input, shape index: {}]
  %s4 = inlined_call_operand.vmem [shape: f32[32,128], index: 4, kind: output, shape index: {}]
  %s5 = sld [smem:[#allocation0]]
  $region26: #{residual_block_pallas.1} parent=0
    _
  %s7 = ssub.s32 1, %s5
  %s8 = scalar_select 0, %s7, %s5
  // Predicated region
  $region2: #{residual_block_pallas.1} parent=0 // pred_check
    _
  $region3: #{residual_block_pallas.1} parent=0 // pred_check_branch
    %10 = sbr.rel (0) target = $region5
  $region4: #{residual_block_pallas.1} parent=0 // pred_region
    _
  $region5: #{residual_block_pallas.1} parent=0 // pred_fallthru
    _
  // Predicated region
  $region6: #{residual_block_pallas.1} parent=0 // pred_check
    _
  $region7: #{residual_block_pallas.1} parent=0 // pred_check_branch
    %12 = sbr.rel (0) target = $region9
  $region8: #{residual_block_pallas.1} parent=0 // pred_region
    _
  $region9: #{residual_block_pallas.1} parent=0 // pred_fallthru
    _
  // Predicated region
  $region10: #{residual_block_pallas.1} parent=0 // pred_check
    _
  $region11: #{residual_block_pallas.1} parent=0 // pred_check_branch
    %14 = sbr.rel (0) target = $region13
  $region12: #{residual_block_pallas.1} parent=0 // pred_region
    _
  $region13: #{residual_block_pallas.1} parent=0 // pred_fallthru
    _
  // Predicated region
  $region14: #{residual_block_pallas.1} parent=0 // pred_check
    _
  $region15: #{residual_block_pallas.1} parent=0 // pred_check_branch
    %16 = sbr.rel (0) target = $region17
  $region16: #{residual_block_pallas.1} parent=0 // pred_region
    _
  $region17: #{residual_block_pallas.1} parent=0 // pred_fallthru
    _
  %v18 = vld [vmem:[%s0] sm:$0xff]
  %v19 = vld [vmem:[%s0 + $0x8] sm:$0xff]
  %v20 = vld [vmem:[%s0 + $0x10] sm:$0xff]
  %v21 = vld [vmem:[%s0 + $0x18] sm:$0xff]
  %v22 = vlaneseq
  %v23 = vshrl.u32 %v22, 7
  %v24 = vadd.s32 %v23, 8
  %v25 = vadd.s32 %v23, 16
  %v26 = vadd.s32 %v23, 24
  %v27 = vadd.s32 %v23, 32
  %v28 = vadd.s32 %v23, 40
  %v29 = vadd.s32 %v23, 48
  %v30 = vadd.s32 %v23, 56
  %v31 = vadd.s32 %v23, 64
  %v32 = vadd.s32 %v23, 72
  %v33 = vadd.s32 %v23, 80
  %v34 = vadd.s32 %v23, 88
  %v35 = vadd.s32 %v23, 96
  %v36 = vadd.s32 %v23, 104
  %v37 = vadd.s32 %v23, 112
  %v38 = vadd.s32 %v23, 120
  %vm39 = vcmp.lt.s32.totalorder %v23, 0
  %v40 = vsub.s32 0, %v23
  %v41 = vsel %vm39, %v40, %v23
  %v42 = vshrl.u32 %v41, 3
  %v43 = vand.u32 %v41, 7
  %v44 = vsub.s32 0, %v43
  %v45 = vsel %vm39, %v44, %v43
  %vm46 = vcmp.lt.s32.totalorder %v24, 0
  %v47 = vsub.s32 0, %v24
  %v48 = vsel %vm46, %v47, %v24
  %v49 = vshrl.u32 %v48, 3
  %v50 = vand.u32 %v48, 7
  %v51 = vsub.s32 0, %v50
  %v52 = vsel %vm46, %v51, %v50
  %vm53 = vcmp.lt.s32.totalorder %v25, 0
  %v54 = vsub.s32 0, %v25
  %v55 = vsel %vm53, %v54, %v25
  %v56 = vshrl.u32 %v55, 3
  %v57 = vand.u32 %v55, 7
  %v58 = vsub.s32 0, %v57
  %v59 = vsel %vm53, %v58, %v57
  %vm60 = vcmp.lt.s32.totalorder %v26, 0
  %v61 = vsub.s32 0, %v26
  %v62 = vsel %vm60, %v61, %v26
  %v63 = vshrl.u32 %v62, 3
  %v64 = vand.u32 %v62, 7
  %v65 = vsub.s32 0, %v64
  %v66 = vsel %vm60, %v65, %v64
  %vm67 = vcmp.lt.s32.totalorder %v27, 0
  %v68 = vsub.s32 0, %v27
  %v69 = vsel %vm67, %v68, %v27
  %v70 = vshrl.u32 %v69, 3
  %v71 = vand.u32 %v69, 7
  %v72 = vsub.s32 0, %v71
  %v73 = vsel %vm67, %v72, %v71
  %vm74 = vcmp.lt.s32.totalorder %v28, 0
  %v75 = vsub.s32 0, %v28
  %v76 = vsel %vm74, %v75, %v28
  %v77 = vshrl.u32 %v76, 3
  %v78 = vand.u32 %v76, 7
  %v79 = vsub.s32 0, %v78
  %v80 = vsel %vm74, %v79, %v78
  %vm81 = vcmp.lt.s32.totalorder %v29, 0
  %v82 = vsub.s32 0, %v29
  %v83 = vsel %vm81, %v82, %v29
  %v84 = vshrl.u32 %v83, 3
  %v85 = vand.u32 %v83, 7
  %v86 = vsub.s32 0, %v85
  %v87 = vsel %vm81, %v86, %v85
  %vm88 = vcmp.lt.s32.totalorder %v30, 0
  %v89 = vsub.s32 0, %v30
  %v90 = vsel %vm88, %v89, %v30
  %v91 = vshrl.u32 %v90, 3
  %v92 = vand.u32 %v90, 7
  %v93 = vsub.s32 0, %v92
  %v94 = vsel %vm88, %v93, %v92
  %vm95 = vcmp.lt.s32.totalorder %v31, 0
  %v96 = vsub.s32 0, %v31
  %v97 = vsel %vm95, %v96, %v31
  %v98 = vshrl.u32 %v97, 3
  %v99 = vand.u32 %v97, 7
  %v100 = vsub.s32 0, %v99
  %v101 = vsel %vm95, %v100, %v99
  %vm102 = vcmp.lt.s32.totalorder %v32, 0
  %v103 = vsub.s32 0, %v32
  %v104 = vsel %vm102, %v103, %v32
  %v105 = vshrl.u32 %v104, 3
  %v106 = vand.u32 %v104, 7
  %v107 = vsub.s32 0, %v106
  %v108 = vsel %vm102, %v107, %v106
  %vm109 = vcmp.lt.s32.totalorder %v33, 0
  %v110 = vsub.s32 0, %v33
  %v111 = vsel %vm109, %v110, %v33
  %v112 = vshrl.u32 %v111, 3
  %v113 = vand.u32 %v111, 7
  %v114 = vsub.s32 0, %v113
  %v115 = vsel %vm109, %v114, %v113
  %vm116 = vcmp.lt.s32.totalorder %v34, 0
  %v117 = vsub.s32 0, %v34
  %v118 = vsel %vm116, %v117, %v34
  %v119 = vshrl.u32 %v118, 3
  %v120 = vand.u32 %v118, 7
  %v121 = vsub.s32 0, %v120
  %v122 = vsel %vm116, %v121, %v120
  %vm123 = vcmp.lt.s32.totalorder %v35, 0
  %v124 = vsub.s32 0, %v35
  %v125 = vsel %vm123, %v124, %v35
  %v126 = vshrl.u32 %v125, 3
  %v127 = vand.u32 %v125, 7
  %v128 = vsub.s32 0, %v127
  %v129 = vsel %vm123, %v128, %v127
  %vm130 = vcmp.lt.s32.totalorder %v36, 0
  %v131 = vsub.s32 0, %v36
  %v132 = vsel %vm130, %v131, %v36
  %v133 = vshrl.u32 %v132, 3
  %v134 = vand.u32 %v132, 7
  %v135 = vsub.s32 0, %v134
  %v136 = vsel %vm130, %v135, %v134
  %vm137 = vcmp.lt.s32.totalorder %v37, 0
  %v138 = vsub.s32 0, %v37
  %v139 = vsel %vm137, %v138, %v37
  %v140 = vshrl.u32 %v139, 3
  %v141 = vand.u32 %v139, 7
  %v142 = vsub.s32 0, %v141
  %v143 = vsel %vm137, %v142, %v141
  %vm144 = vcmp.lt.s32.totalorder %v38, 0
  %v145 = vsub.s32 0, %v38
  %v146 = vsel %vm144, %v145, %v38
  %v147 = vshrl.u32 %v146, 3
  %v148 = vand.u32 %v146, 7
  %v149 = vsub.s32 0, %v148
  %v150 = vsel %vm144, %v149, %v148
  %vm151 = vcmp.ne.s32.totalorder %v45, 0
  %vm152 = vcmp.ne.s32.totalorder %v52, 0
  %vm153 = vcmp.ne.s32.totalorder %v59, 0
  %vm154 = vcmp.ne.s32.totalorder %v66, 0
  %vm155 = vcmp.ne.s32.totalorder %v73, 0
  %vm156 = vcmp.ne.s32.totalorder %v80, 0
  %vm157 = vcmp.ne.s32.totalorder %v87, 0
  %vm158 = vcmp.ne.s32.totalorder %v94, 0
  %vm159 = vcmp.ne.s32.totalorder %v101, 0
  %vm160 = vcmp.ne.s32.totalorder %v108, 0
  %vm161 = vcmp.ne.s32.totalorder %v115, 0
  %vm162 = vcmp.ne.s32.totalorder %v122, 0
  %vm163 = vcmp.ne.s32.totalorder %v129, 0
  %vm164 = vcmp.ne.s32.totalorder %v136, 0
  %vm165 = vcmp.ne.s32.totalorder %v143, 0
  %vm166 = vcmp.ne.s32.totalorder %v150, 0
  %vm167 = vcmp.lt.s32.totalorder %v45, 0
  %vm168 = vcmp.lt.s32.totalorder %v52, 0
  %vm169 = vcmp.lt.s32.totalorder %v59, 0
  %vm170 = vcmp.lt.s32.totalorder %v66, 0
  %vm171 = vcmp.lt.s32.totalorder %v73, 0
  %vm172 = vcmp.lt.s32.totalorder %v80, 0
  %vm173 = vcmp.lt.s32.totalorder %v87, 0
  %vm174 = vcmp.lt.s32.totalorder %v94, 0
  %vm175 = vcmp.lt.s32.totalorder %v101, 0
  %vm176 = vcmp.lt.s32.totalorder %v108, 0
  %vm177 = vcmp.lt.s32.totalorder %v115, 0
  %vm178 = vcmp.lt.s32.totalorder %v122, 0
  %vm179 = vcmp.lt.s32.totalorder %v129, 0
  %vm180 = vcmp.lt.s32.totalorder %v136, 0
  %vm181 = vcmp.lt.s32.totalorder %v143, 0
  %vm182 = vcmp.lt.s32.totalorder %v150, 0
  %vm183 = vmand %vm167, %vm151
  %vm184 = vmand %vm168, %vm152
  %vm185 = vmand %vm169, %vm153
  %vm186 = vmand %vm170, %vm154
  %vm187 = vmand %vm171, %vm155
  %vm188 = vmand %vm172, %vm156
  %vm189 = vmand %vm173, %vm157
  %vm190 = vmand %vm174, %vm158
  %vm191 = vmand %vm175, %vm159
  %vm192 = vmand %vm176, %vm160
  %vm193 = vmand %vm177, %vm161
  %vm194 = vmand %vm178, %vm162
  %vm195 = vmand %vm179, %vm163
  %vm196 = vmand %vm180, %vm164
  %vm197 = vmand %vm181, %vm165
  %vm198 = vmand %vm182, %vm166
  %v199 = vadd.s32 %v45, 8
  %v200 = vadd.s32 %v52, 8
  %v201 = vadd.s32 %v59, 8
  %v202 = vadd.s32 %v66, 8
  %v203 = vadd.s32 %v73, 8
  %v204 = vadd.s32 %v80, 8
  %v205 = vadd.s32 %v87, 8
  %v206 = vadd.s32 %v94, 8
  %v207 = vadd.s32 %v101, 8
  %v208 = vadd.s32 %v108, 8
  %v209 = vadd.s32 %v115, 8
  %v210 = vadd.s32 %v122, 8
  %v211 = vadd.s32 %v129, 8
  %v212 = vadd.s32 %v136, 8
  %v213 = vadd.s32 %v143, 8
  %v214 = vadd.s32 %v150, 8
  %v215 = vsel %vm183, %v199, %v45
  %v216 = vsel %vm184, %v200, %v52
  %v217 = vsel %vm185, %v201, %v59
  %v218 = vsel %vm186, %v202, %v66
  %v219 = vsel %vm187, %v203, %v73
  %v220 = vsel %vm188, %v204, %v80
  %v221 = vsel %vm189, %v205, %v87
  %v222 = vsel %vm190, %v206, %v94
  %v223 = vsel %vm191, %v207, %v101
  %v224 = vsel %vm192, %v208, %v108
  %v225 = vsel %vm193, %v209, %v115
  %v226 = vsel %vm194, %v210, %v122
  %v227 = vsel %vm195, %v211, %v129
  %v228 = vsel %vm196, %v212, %v136
  %v229 = vsel %vm197, %v213, %v143
  %v230 = vsel %vm198, %v214, %v150
  %v231 = vlaneseq
  %v232 = vand.u32 %v231, 127
  %vm233 = vcmp.eq.s32.totalorder %v215, %v232
  %vm234 = vcmp.eq.s32.totalorder %v216, %v232
  %vm235 = vcmp.eq.s32.totalorder %v217, %v232
  %vm236 = vcmp.eq.s32.totalorder %v218, %v232
  %vm237 = vcmp.eq.s32.totalorder %v219, %v232
  %vm238 = vcmp.eq.s32.totalorder %v220, %v232
  %vm239 = vcmp.eq.s32.totalorder %v221, %v232
  %vm240 = vcmp.eq.s32.totalorder %v222, %v232
  %vm241 = vcmp.eq.s32.totalorder %v223, %v232
  %vm242 = vcmp.eq.s32.totalorder %v224, %v232
  %vm243 = vcmp.eq.s32.totalorder %v225, %v232
  %vm244 = vcmp.eq.s32.totalorder %v226, %v232
  %vm245 = vcmp.eq.s32.totalorder %v227, %v232
  %vm246 = vcmp.eq.s32.totalorder %v228, %v232
  %vm247 = vcmp.eq.s32.totalorder %v229, %v232
  %vm248 = vcmp.eq.s32.totalorder %v230, %v232
  %v249 = vsel %vm233, 1, 0
  %v250 = vsel %vm234, 1, 0
  %v251 = vsel %vm235, 1, 0
  %v252 = vsel %vm236, 1, 0
  %v253 = vsel %vm237, 1, 0
  %v254 = vsel %vm238, 1, 0
  %v255 = vsel %vm239, 1, 0
  %v256 = vsel %vm240, 1, 0
  %v257 = vsel %vm241, 1, 0
  %v258 = vsel %vm242, 1, 0
  %v259 = vsel %vm243, 1, 0
  %v260 = vsel %vm244, 1, 0
  %v261 = vsel %vm245, 1, 0
  %v262 = vsel %vm246, 1, 0
  %v263 = vsel %vm247, 1, 0
  %v264 = vsel %vm248, 1, 0
  %v265 = vcvt.s32.f32 %v249
  %v266 = vcvt.s32.f32 %v250
  %v267 = vcvt.s32.f32 %v251
  %v268 = vcvt.s32.f32 %v252
  %v269 = vcvt.s32.f32 %v253
  %v270 = vcvt.s32.f32 %v254
  %v271 = vcvt.s32.f32 %v255
  %v272 = vcvt.s32.f32 %v256
  %v273 = vcvt.s32.f32 %v257
  %v274 = vcvt.s32.f32 %v258
  %v275 = vcvt.s32.f32 %v259
  %v276 = vcvt.s32.f32 %v260
  %v277 = vcvt.s32.f32 %v261
  %v278 = vcvt.s32.f32 %v262
  %v279 = vcvt.s32.f32 %v263
  %v280 = vcvt.s32.f32 %v264
  %vm281 = vcmp.lt.s32.totalorder %v232, 0
  %v282 = vsub.s32 0, %v232
  %v283 = vsel %vm281, %v282, %v232
  %v284 = vshrl.u32 %v283, 3
  %v285 = vand.u32 %v283, 7
  %v286 = vsub.s32 0, %v285
  %v287 = vsel %vm281, %v286, %v285
  %vm288 = vcmp.ne.s32.totalorder %v287, 0
  %vm289 = vcmp.lt.s32.totalorder %v287, 0
  %vm290 = vmand %vm289, %vm288
  %v291 = vadd.s32 %v287, 8
  %v292 = vsel %vm290, %v291, %v287
  %vm293 = vcmp.eq.s32.totalorder %v23, %v292
  %v294 = vsel %vm293, 1, 0
  %v295 = vcvt.s32.f32 %v294
  %vm296 = vcmp.lt.s32.totalorder %v23, 0
  %v297 = vsub.s32 0, %v23
  %v298 = vsel %vm296, %v297, %v23
  %v299 = vshrl.u32 %v298, 4
  %v300 = vand.u32 %v298, 15
  %v301 = vsub.s32 0, %v300
  %v302 = vsel %vm296, %v301, %v300
  %vm303 = vcmp.lt.s32.totalorder %v24, 0
  %v304 = vsub.s32 0, %v24
  %v305 = vsel %vm303, %v304, %v24
  %v306 = vshrl.u32 %v305, 4
  %v307 = vand.u32 %v305, 15
  %v308 = vsub.s32 0, %v307
  %v309 = vsel %vm303, %v308, %v307
  %vm310 = vcmp.lt.s32.totalorder %v25, 0
  %v311 = vsub.s32 0, %v25
  %v312 = vsel %vm310, %v311, %v25
  %v313 = vshrl.u32 %v312, 4
  %v314 = vand.u32 %v312, 15
  %v315 = vsub.s32 0, %v314
  %v316 = vsel %vm310, %v315, %v314
  %vm317 = vcmp.lt.s32.totalorder %v26, 0
  %v318 = vsub.s32 0, %v26
  %v319 = vsel %vm317, %v318, %v26
  %v320 = vshrl.u32 %v319, 4
  %v321 = vand.u32 %v319, 15
  %v322 = vsub.s32 0, %v321
  %v323 = vsel %vm317, %v322, %v321
  %vm324 = vcmp.ne.s32.totalorder %v302, 0
  %vm325 = vcmp.ne.s32.totalorder %v309, 0
  %vm326 = vcmp.ne.s32.totalorder %v316, 0
  %vm327 = vcmp.ne.s32.totalorder %v323, 0
  %vm328 = vcmp.lt.s32.totalorder %v302, 0
  %vm329 = vcmp.lt.s32.totalorder %v309, 0
  %vm330 = vcmp.lt.s32.totalorder %v316, 0
  %vm331 = vcmp.lt.s32.totalorder %v323, 0
  %vm332 = vmand %vm328, %vm324
  %vm333 = vmand %vm329, %vm325
  %vm334 = vmand %vm330, %vm326
  %vm335 = vmand %vm331, %vm327
  %v336 = vadd.s32 %v302, 16
  %v337 = vadd.s32 %v309, 16
  %v338 = vadd.s32 %v316, 16
  %v339 = vadd.s32 %v323, 16
  %v340 = vsel %vm332, %v336, %v302
  %v341 = vsel %vm333, %v337, %v309
  %v342 = vsel %vm334, %v338, %v316
  %v343 = vsel %vm335, %v339, %v323
  %vm344 = vcmp.eq.s32.totalorder %v340, 0
  %vm345 = vcmp.eq.s32.totalorder %v341, 0
  %vm346 = vcmp.eq.s32.totalorder %v342, 0
  %vm347 = vcmp.eq.s32.totalorder %v343, 0
  %vm348 = vcmp.eq.s32.totalorder %v340, 15
  %vm349 = vcmp.eq.s32.totalorder %v341, 15
  %vm350 = vcmp.eq.s32.totalorder %v342, 15
  %vm351 = vcmp.eq.s32.totalorder %v343, 15
  %v352 = vld [vmem:[%s3] sm:$0x1]
  %v353 = vld [vmem:[%s3 + $0x1] sm:$0x1]
  %v354 = vld [vmem:[%s3 + $0x2] sm:$0x1]
  %v355 = vld [vmem:[%s3 + $0x3] sm:$0x1]
  %v356 = vrot.slane %v18, 7
  %v357 = vrot.slane %v19, 7
  %v358 = vrot.slane %v20, 7
  %v359 = vrot.slane %v21, 7
  %vm360 = vcmp.lt.s32.totalorder %v23, 1
  %v361 = vsel %vm360, %v358, %v359
  %v362 = vsel %vm360, %v357, %v358
  %v363 = vsel %vm360, %v356, %v357
  %v364 = vsel %vm360, %v359, %v356
  %v365 = vsel %vm344, 0.0, %v364
  %v366 = vsel %vm345, 0.0, %v363
  %v367 = vsel %vm346, 0.0, %v362
  %v368 = vsel %vm347, 0.0, %v361
  %v369 = vrot.slane %v18, 1
  %v370 = vrot.slane %v19, 1
  %v371 = vrot.slane %v20, 1
  %v372 = vrot.slane %v21, 1
  %vm373 = vcmp.lt.s32.totalorder %v23, 7
  %v374 = vsel %vm373, %v371, %v372
  %v375 = vsel %vm373, %v370, %v371
  %v376 = vsel %vm373, %v369, %v370
  %v377 = vsel %vm373, %v372, %v369
  %v378 = vsel %vm348, 0.0, %v376
  %v379 = vsel %vm349, 0.0, %v375
  %v380 = vsel %vm350, 0.0, %v374
  %v381 = vsel %vm351, 0.0, %v377
  %v382 = vpack.c.bf16 %v366, %v365
  %v383 = vpack.c.bf16 %v19, %v18
  %v384 = vpack.c.bf16 %v379, %v378
  %v385 = vpack.c.bf16 %v368, %v367
  %v386 = vpack.c.bf16 %v21, %v20
  %v387 = vpack.c.bf16 %v381, %v380
  %v388 = vld [vmem:[%s1] sm:$0xf]
  %v389 = vld [vmem:[%s1 + $0x4] sm:$0xf]
  %v390 = vld [vmem:[%s1 + $0x8] sm:$0xf]
  %v391 = vld [vmem:[%s1 + $0xc] sm:$0xf]
  %v392 = vld [vmem:[%s1 + $0x10] sm:$0xf]
  %v393 = vld [vmem:[%s1 + $0x14] sm:$0xf]
  %v394 = vld [vmem:[%s1 + $0x18] sm:$0xf]
  %v395 = vld [vmem:[%s1 + $0x1c] sm:$0xf]
  %v396 = vld [vmem:[%s1 + $0x20] sm:$0xf]
  %v397 = vld [vmem:[%s1 + $0x24] sm:$0xf]
  %v398 = vld [vmem:[%s1 + $0x28] sm:$0xf]
  %v399 = vld [vmem:[%s1 + $0x2c] sm:$0xf]
  %v400 = vld [vmem:[%s1 + $0x30] sm:$0xf]
  %v401 = vld [vmem:[%s1 + $0x34] sm:$0xf]
  %v402 = vld [vmem:[%s1 + $0x38] sm:$0xf]
  %v403 = vld [vmem:[%s1 + $0x3c] sm:$0xf]
  %v404 = vld [vmem:[%s1 + $0x40] sm:$0xf]
  %v405 = vld [vmem:[%s1 + $0x44] sm:$0xf]
  %v406 = vld [vmem:[%s1 + $0x48] sm:$0xf]
  %v407 = vld [vmem:[%s1 + $0x4c] sm:$0xf]
  %v408 = vld [vmem:[%s1 + $0x50] sm:$0xf]
  %v409 = vld [vmem:[%s1 + $0x54] sm:$0xf]
  %v410 = vld [vmem:[%s1 + $0x58] sm:$0xf]
  %v411 = vld [vmem:[%s1 + $0x5c] sm:$0xf]
  %v412 = vld [vmem:[%s1 + $0x60] sm:$0xf]
  %v413 = vld [vmem:[%s1 + $0x64] sm:$0xf]
  %v414 = vld [vmem:[%s1 + $0x68] sm:$0xf]
  %v415 = vld [vmem:[%s1 + $0x6c] sm:$0xf]
  %v416 = vld [vmem:[%s1 + $0x70] sm:$0xf]
  %v417 = vld [vmem:[%s1 + $0x74] sm:$0xf]
  %v418 = vld [vmem:[%s1 + $0x78] sm:$0xf]
  %v419 = vld [vmem:[%s1 + $0x7c] sm:$0xf]
  %v420 = vld [vmem:[%s1 + $0x80] sm:$0xf]
  %v421 = vld [vmem:[%s1 + $0x84] sm:$0xf]
  %v422 = vld [vmem:[%s1 + $0x88] sm:$0xf]
  %v423 = vld [vmem:[%s1 + $0x8c] sm:$0xf]
  %v424 = vld [vmem:[%s1 + $0x90] sm:$0xf]
  %v425 = vld [vmem:[%s1 + $0x94] sm:$0xf]
  %v426 = vld [vmem:[%s1 + $0x98] sm:$0xf]
  %v427 = vld [vmem:[%s1 + $0x9c] sm:$0xf]
  %v428 = vld [vmem:[%s1 + $0xa0] sm:$0xf]
  %v429 = vld [vmem:[%s1 + $0xa4] sm:$0xf]
  %v430 = vld [vmem:[%s1 + $0xa8] sm:$0xf]
  %v431 = vld [vmem:[%s1 + $0xac] sm:$0xf]
  %v432 = vld [vmem:[%s1 + $0xb0] sm:$0xf]
  %v433 = vld [vmem:[%s1 + $0xb4] sm:$0xf]
  %v434 = vld [vmem:[%s1 + $0xb8] sm:$0xf]
  %v435 = vld [vmem:[%s1 + $0xbc] sm:$0xf]
  %v484 = vunpack.c.l.b16 %v388
  %v485 = vunpack.c.l.b16 %v389
  %v486 = vunpack.c.l.b16 %v390
  %v487 = vunpack.c.l.b16 %v391
  %v488 = vunpack.c.l.b16 %v392
  %v489 = vunpack.c.l.b16 %v393
  %v490 = vunpack.c.l.b16 %v394
  %v491 = vunpack.c.l.b16 %v395
  %v492 = vunpack.c.l.b16 %v396
  %v493 = vunpack.c.l.b16 %v397
  %v494 = vunpack.c.l.b16 %v398
  %v495 = vunpack.c.l.b16 %v399
  %v496 = vunpack.c.l.b16 %v400
  %v497 = vunpack.c.l.b16 %v401
  %v498 = vunpack.c.l.b16 %v402
  %v499 = vunpack.c.l.b16 %v403
  %v500 = vunpack.c.l.b16 %v404
  %v501 = vunpack.c.l.b16 %v405
  %v502 = vunpack.c.l.b16 %v406
  %v503 = vunpack.c.l.b16 %v407
  %v504 = vunpack.c.l.b16 %v408
  %v505 = vunpack.c.l.b16 %v409
  %v506 = vunpack.c.l.b16 %v410
  %v507 = vunpack.c.l.b16 %v411
  %v508 = vunpack.c.l.b16 %v412
  %v509 = vunpack.c.l.b16 %v413
  %v510 = vunpack.c.l.b16 %v414
  %v511 = vunpack.c.l.b16 %v415
  %v512 = vunpack.c.l.b16 %v416
  %v513 = vunpack.c.l.b16 %v417
  %v514 = vunpack.c.l.b16 %v418
  %v515 = vunpack.c.l.b16 %v419
  %v516 = vunpack.c.l.b16 %v420
  %v517 = vunpack.c.l.b16 %v421
  %v518 = vunpack.c.l.b16 %v422
  %v519 = vunpack.c.l.b16 %v423
  %v520 = vunpack.c.l.b16 %v424
  %v521 = vunpack.c.l.b16 %v425
  %v522 = vunpack.c.l.b16 %v426
  %v523 = vunpack.c.l.b16 %v427
  %v524 = vunpack.c.l.b16 %v428
  %v525 = vunpack.c.l.b16 %v429
  %v526 = vunpack.c.l.b16 %v430
  %v527 = vunpack.c.l.b16 %v431
  %v528 = vunpack.c.l.b16 %v432
  %v529 = vunpack.c.l.b16 %v433
  %v530 = vunpack.c.l.b16 %v434
  %v531 = vunpack.c.l.b16 %v435
  %v532 = vpack.c.b16 %v485, %v484
  %v533 = vpack.c.b16 %v487, %v486
  %v534 = vpack.c.b16 %v489, %v488
  %v535 = vpack.c.b16 %v491, %v490
  %v536 = vpack.c.b16 %v493, %v492
  %v537 = vpack.c.b16 %v495, %v494
  %v538 = vpack.c.b16 %v497, %v496
  %v539 = vpack.c.b16 %v499, %v498
  %v540 = vpack.c.b16 %v501, %v500
  %v541 = vpack.c.b16 %v503, %v502
  %v542 = vpack.c.b16 %v505, %v504
  %v543 = vpack.c.b16 %v507, %v506
  %v544 = vpack.c.b16 %v509, %v508
  %v545 = vpack.c.b16 %v511, %v510
  %v546 = vpack.c.b16 %v513, %v512
  %v547 = vpack.c.b16 %v515, %v514
  %v548 = vpack.c.b16 %v517, %v516
  %v549 = vpack.c.b16 %v519, %v518
  %v550 = vpack.c.b16 %v521, %v520
  %v551 = vpack.c.b16 %v523, %v522
  %v552 = vpack.c.b16 %v525, %v524
  %v553 = vpack.c.b16 %v527, %v526
  %v554 = vpack.c.b16 %v529, %v528
  %v555 = vpack.c.b16 %v531, %v530
  %580 = vmatprep.subr.bf16.mxu0 0
  %581 = vmatpush1.bf16.msra.mxu0 %v532
  %582 = vmatprep.subr.bf16.mxu0 0
  %583 = vmatpush1.bf16.msra.mxu0 %v533
  %584 = vmatprep.subr.bf16.mxu0 0
  %585 = vmatpush1.bf16.msra.mxu0 %v534
  %586 = vmatprep.subr.bf16.mxu0 0
  %587 = vmatpush1.bf16.msra.mxu0 %v535
  %588 = vmatprep.subr.bf16.mxu0 0
  %589 = vmatpush1.bf16.msra.mxu0 %v536
  %590 = vmatprep.subr.bf16.mxu0 0
  %591 = vmatpush1.bf16.msra.mxu0 %v537
  %592 = vmatprep.subr.bf16.mxu0 0
  %593 = vmatpush1.bf16.msra.mxu0 %v538
  %594 = vmatprep.subr.bf16.mxu0 0
  %595 = vmatpush1.bf16.msra.mxu0 %v539
  %596 = vmatprep.subr.bf16.mxu0 0
  %597 = vmatpush1.bf16.msra.mxu0 %v540
  %598 = vmatprep.subr.bf16.mxu0 0
  %599 = vmatpush1.bf16.msra.mxu0 %v541
  %600 = vmatprep.subr.bf16.mxu0 0
  %601 = vmatpush1.bf16.msra.mxu0 %v542
  %602 = vmatprep.subr.bf16.mxu0 0
  %603 = vmatpush1.bf16.msra.mxu0 %v543
  %604 = vmatprep.subr.bf16.mxu0 0
  %605 = vmatpush1.bf16.msra.mxu0 %v544
  %606 = vmatprep.subr.bf16.mxu0 0
  %607 = vmatpush1.bf16.msra.mxu0 %v545
  %608 = vmatprep.subr.bf16.mxu0 0
  %609 = vmatpush1.bf16.msra.mxu0 %v546
  %610 = vmatprep.subr.bf16.mxu0 0
  %611 = vmatpush1.bf16.msra.mxu0 %v547
  %612 = vmatprep.mubr.bf16.mxu0 %v383
  %613 = vmatmul.mubr.bf16.gmra.mrb[0].mxu0 %v382
  %v614 = vpop.f32.mrb[0].mxu0
  %v615 = vadd.f32 0.0, %v614
  %v616 = vpop.f32.mrb[0].mxu0
  %v617 = vpop.f32.mrb[0].mxu0
  %v618 = vadd.f32 0.0, %v617
  %v619 = vpop.f32.mrb[0].mxu0
  %620 = vmatprep.mubr.bf16.mxu0 %v386
  %621 = vmatmul.mubr.bf16.gmra.mrb[0].mxu0 %v385
  %v622 = vpop.f32.mrb[0].mxu0
  %v623 = vadd.f32 0.0, %v622
  %v624 = vpop.f32.mrb[0].mxu0
  %v625 = vpop.f32.mrb[0].mxu0
  %v626 = vadd.f32 0.0, %v625
  %v627 = vpop.f32.mrb[0].mxu0
  %628 = vdwg.mxu0
  %629 = vmatprep.subr.bf16.mxu0 0
  %630 = vmatpush1.bf16.msra.mxu0 %v548
  %631 = vmatprep.subr.bf16.mxu0 0
  %632 = vmatpush1.bf16.msra.mxu0 %v549
  %633 = vmatprep.subr.bf16.mxu0 0
  %634 = vmatpush1.bf16.msra.mxu0 %v550
  %635 = vmatprep.subr.bf16.mxu0 0
  %636 = vmatpush1.bf16.msra.mxu0 %v551
  %637 = vmatprep.subr.bf16.mxu0 0
  %638 = vmatpush1.bf16.msra.mxu0 %v552
  %639 = vmatprep.subr.bf16.mxu0 0
  %640 = vmatpush1.bf16.msra.mxu0 %v553
  %641 = vmatprep.subr.bf16.mxu0 0
  %642 = vmatpush1.bf16.msra.mxu0 %v554
  %643 = vmatprep.subr.bf16.mxu0 0
  %644 = vmatpush1.bf16.msra.mxu0 %v555
  %645 = vmatprep.subr.bf16.mxu0 0
  %646 = vmatpush1.bf16.msra.mxu0 0
  %647 = vmatprep.subr.bf16.mxu0 0
  %648 = vmatpush1.bf16.msra.mxu0 0
  %649 = vmatprep.subr.bf16.mxu0 0
  %650 = vmatpush1.bf16.msra.mxu0 0
  %651 = vmatprep.subr.bf16.mxu0 0
  %652 = vmatpush1.bf16.msra.mxu0 0
  %653 = vmatprep.subr.bf16.mxu0 0
  %654 = vmatpush1.bf16.msra.mxu0 0
  %655 = vmatprep.subr.bf16.mxu0 0
  %656 = vmatpush1.bf16.msra.mxu0 0
  %657 = vmatprep.subr.bf16.mxu0 0
  %658 = vmatpush1.bf16.msra.mxu0 0
  %659 = vmatprep.subr.bf16.mxu0 0
  %660 = vmatpush1.bf16.msra.mxu0 0
  %661 = vmatprep.mubr.bf16.mxu0 0
  %662 = vmatmul.mubr.bf16.gmra.mrb[0].mxu0 %v384
  %v663 = vpop.f32.mrb[0].mxu0
  %v664 = vadd.f32 %v615, %v663
  %v665 = vpop.f32.mrb[0].mxu0
  %v666 = vpop.f32.mrb[0].mxu0
  %v667 = vadd.f32 %v618, %v666
  %v668 = vpop.f32.mrb[0].mxu0
  %669 = vmatprep.mubr.bf16.mxu0 0
  %670 = vmatmul.mubr.bf16.gmra.mrb[0].mxu0 %v387
  %v671 = vpop.f32.mrb[0].mxu0
  %v672 = vadd.f32 %v623, %v671
  %v673 = vpop.f32.mrb[0].mxu0
  %v674 = vpop.f32.mrb[0].mxu0
  %v675 = vadd.f32 %v626, %v674
  %v676 = vpop.f32.mrb[0].mxu0
  %677 = vdwg.mxu0
  %v678 = vadd.f32 %v664, %v667
  %v679 = vadd.f32 %v678, %v672
  %v680 = vadd.f32 %v679, %v675
  %v681 = vrot.slane %v680, 4
  %v682 = vadd.f32 %v680, %v681
  %v683 = vrot.slane %v682, 2
  %v684 = vadd.f32 %v682, %v683
  %v685 = vrot.slane %v684, 1
  %v686 = vadd.f32 %v684, %v685
  %v687 = vmul.f32 %v664, %v664
  %v688 = vmul.f32 %v667, %v667
  %v689 = vmul.f32 %v672, %v672
  %v690 = vmul.f32 %v675, %v675
  %v691 = vadd.f32 %v687, %v688
  %v692 = vadd.f32 %v691, %v689
  %v693 = vadd.f32 %v692, %v690
  %v694 = vrot.slane %v693, 4
  %v695 = vadd.f32 %v693, %v694
  %v696 = vrot.slane %v695, 2
  %v697 = vadd.f32 %v695, %v696
  %v698 = vrot.slane %v697, 1
  %v699 = vadd.f32 %v697, %v698
  %vm700 = vcmask 1040384
  %v701 = vsel %vm700, %v686, %v699
  %702 = vmatprep.subr.mxu0 0.0
  %703 = vmatpush1.msra.mxu0 %v265
  %704 = vmatprep.subr.mxu0 0.0
  %705 = vmatpush1.msra.mxu0 %v266
  %706 = vmatprep.subr.mxu0 0.0
  %707 = vmatpush1.msra.mxu0 %v267
  %708 = vmatprep.subr.mxu0 0.0
  %709 = vmatpush1.msra.mxu0 %v268
  %710 = vmatprep.subr.mxu0 0.0
  %711 = vmatpush1.msra.mxu0 %v269
  %712 = vmatprep.subr.mxu0 0.0
  %713 = vmatpush1.msra.mxu0 %v270
  %714 = vmatprep.subr.mxu0 0.0
  %715 = vmatpush1.msra.mxu0 %v271
  %716 = vmatprep.subr.mxu0 0.0
  %717 = vmatpush1.msra.mxu0 %v272
  %718 = vmatprep.subr.mxu0 0.0
  %719 = vmatpush1.msra.mxu0 %v273
  %720 = vmatprep.subr.mxu0 0.0
  %721 = vmatpush1.msra.mxu0 %v274
  %722 = vmatprep.subr.mxu0 0.0
  %723 = vmatpush1.msra.mxu0 %v275
  %724 = vmatprep.subr.mxu0 0.0
  %725 = vmatpush1.msra.mxu0 %v276
  %726 = vmatprep.subr.mxu0 0.0
  %727 = vmatpush1.msra.mxu0 %v277
  %728 = vmatprep.subr.mxu0 0.0
  %729 = vmatpush1.msra.mxu0 %v278
  %730 = vmatprep.subr.mxu0 0.0
  %731 = vmatpush1.msra.mxu0 %v279
  %732 = vmatprep.subr.mxu0 0.0
  %733 = vmatpush1.msra.mxu0 %v280
  %734 = vmatprep.subr.mxu0 0.0
  %735 = vmatpush1.msra.mxu0 0.0
  %736 = vmatprep.subr.mxu0 0.0
  %737 = vmatpush1.msra.mxu0 0.0
  %738 = vmatprep.subr.mxu0 0.0
  %739 = vmatpush1.msra.mxu0 0.0
  %740 = vmatprep.subr.mxu0 0.0
  %741 = vmatpush1.msra.mxu0 0.0
  %742 = vmatprep.subr.mxu0 0.0
  %743 = vmatpush1.msra.mxu0 0.0
  %744 = vmatprep.subr.mxu0 0.0
  %745 = vmatpush1.msra.mxu0 0.0
  %746 = vmatprep.subr.mxu0 0.0
  %747 = vmatpush1.msra.mxu0 0.0
  %748 = vmatprep.subr.mxu0 0.0
  %749 = vmatpush1.msra.mxu0 0.0
  %750 = vmatprep.subr.mxu0 0.0
  %751 = vmatpush1.msra.mxu0 0.0
  %752 = vmatprep.subr.mxu0 0.0
  %753 = vmatpush1.msra.mxu0 0.0
  %754 = vmatprep.subr.mxu0 0.0
  %755 = vmatpush1.msra.mxu0 0.0
  %756 = vmatprep.subr.mxu0 0.0
  %757 = vmatpush1.msra.mxu0 0.0
  %758 = vmatprep.subr.mxu0 0.0
  %759 = vmatpush1.msra.mxu0 0.0
  %760 = vmatprep.subr.mxu0 0.0
  %761 = vmatpush1.msra.mxu0 0.0
  %762 = vmatprep.subr.mxu0 0.0
  %763 = vmatpush1.msra.mxu0 0.0
  %764 = vmatprep.subr.mxu0 0.0
  %765 = vmatpush1.msra.mxu0 0.0
  %766 = vmatprep.mubr.f32.mxu0 0.0
  %767 = vmatmul.mubr.f32.gmra.mrb[0].mxu0 %v701
  %v768 = vpop.f32.mrb[0].mxu0
  %v769 = vadd.f32 0.0, %v768
  %v770 = vpop.f32.mrb[0].mxu0
  %771 = vdwg.mxu0
  %v772 = vmul.f32 %v769, 0.001953125
  %v773 = vmul.f32 %v772, %v772
  %v775 = vrot.slane %v773, 7
  %v777 = vsub.f32 %v772, %v775
  %v778 = vadd.f32 %v777, 1e-05
  %v779 = vrsqrt.pop %v778
  %v781 = vrot.slane %v779, 1
  %v783 = vmul.f32 %v352, %v781
  %v784 = vmul.f32 %v772, %v783
  %v785 = vsub.f32 %v353, %v784
  %v787 = vrot.slane %v785, 7
  %v789 = vsel %vm700, %v783, %v787
  %vm790 = vcmask 64512
  %v792 = vsel %vm790, %v789, 0
  %794 = vmatprep.subr.mxu0 0.0
  %795 = vmatpush1.msra.mxu0 %v295
  %796 = vmatprep.subr.mxu0 0.0
  %797 = vmatpush1.msra.mxu0 0.0
  %798 = vmatprep.subr.mxu0 0.0
  %799 = vmatpush1.msra.mxu0 0.0
  %800 = vmatprep.subr.mxu0 0.0
  %801 = vmatpush1.msra.mxu0 0.0
  %802 = vmatprep.subr.mxu0 0.0
  %803 = vmatpush1.msra.mxu0 0.0
  %804 = vmatprep.subr.mxu0 0.0
  %805 = vmatpush1.msra.mxu0 0.0
  %806 = vmatprep.subr.mxu0 0.0
  %807 = vmatpush1.msra.mxu0 0.0
  %808 = vmatprep.subr.mxu0 0.0
  %809 = vmatpush1.msra.mxu0 0.0
  %810 = vmatprep.subr.mxu0 0.0
  %811 = vmatpush1.msra.mxu0 0.0
  %812 = vmatprep.subr.mxu0 0.0
  %813 = vmatpush1.msra.mxu0 0.0
  %814 = vmatprep.subr.mxu0 0.0
  %815 = vmatpush1.msra.mxu0 0.0
  %816 = vmatprep.subr.mxu0 0.0
  %817 = vmatpush1.msra.mxu0 0.0
  %818 = vmatprep.subr.mxu0 0.0
  %819 = vmatpush1.msra.mxu0 0.0
  %820 = vmatprep.subr.mxu0 0.0
  %821 = vmatpush1.msra.mxu0 0.0
  %822 = vmatprep.subr.mxu0 0.0
  %823 = vmatpush1.msra.mxu0 0.0
  %824 = vmatprep.subr.mxu0 0.0
  %825 = vmatpush1.msra.mxu0 0.0
  %826 = vmatprep.subr.mxu0 0.0
  %827 = vmatpush1.msra.mxu0 0.0
  %828 = vmatprep.subr.mxu0 0.0
  %829 = vmatpush1.msra.mxu0 0.0
  %830 = vmatprep.subr.mxu0 0.0
  %831 = vmatpush1.msra.mxu0 0.0
  %832 = vmatprep.subr.mxu0 0.0
  %833 = vmatpush1.msra.mxu0 0.0
  %834 = vmatprep.subr.mxu0 0.0
  %835 = vmatpush1.msra.mxu0 0.0
  %836 = vmatprep.subr.mxu0 0.0
  %837 = vmatpush1.msra.mxu0 0.0
  %838 = vmatprep.subr.mxu0 0.0
  %839 = vmatpush1.msra.mxu0 0.0
  %840 = vmatprep.subr.mxu0 0.0
  %841 = vmatpush1.msra.mxu0 0.0
  %842 = vmatprep.subr.mxu0 0.0
  %843 = vmatpush1.msra.mxu0 0.0
  %844 = vmatprep.subr.mxu0 0.0
  %845 = vmatpush1.msra.mxu0 0.0
  %846 = vmatprep.subr.mxu0 0.0
  %847 = vmatpush1.msra.mxu0 0.0
  %848 = vmatprep.subr.mxu0 0.0
  %849 = vmatpush1.msra.mxu0 0.0
  %850 = vmatprep.subr.mxu0 0.0
  %851 = vmatpush1.msra.mxu0 0.0
  %852 = vmatprep.subr.mxu0 0.0
  %853 = vmatpush1.msra.mxu0 0.0
  %854 = vmatprep.subr.mxu0 0.0
  %855 = vmatpush1.msra.mxu0 0.0
  %856 = vmatprep.subr.mxu0 0.0
  %857 = vmatpush1.msra.mxu0 0.0
  %858 = vmatprep.mubr.f32.mxu0 0.0
  %859 = vmatmul.mubr.f32.gmra.mrb[0].mxu0 %v792
  %v860 = vpop.f32.mrb[0].mxu0
  %v861 = vadd.f32 0.0, %v860
  %v862 = vpop.f32.mrb[0].mxu0
  %863 = vdwg.mxu0
  %v864 = vlaneseq
  %v865 = vshrl.u32 %v864, 7
  %v866 = vsub.s32 0, %v865
  %v867 = vrot.slane %v861, %v866
  %v868 = vmul.f32 %v664, %v867
  %v869 = vmul.f32 %v667, %v867
  %v870 = vmul.f32 %v672, %v867
  %v871 = vmul.f32 %v675, %v867
  %v872 = vlaneseq
  %v873 = vshrl.u32 %v872, 7
  %v874 = vsub.s32 1, %v873
  %v875 = vrot.slane %v861, %v874
  %v876 = vadd.f32 %v868, %v875
  %v877 = vadd.f32 %v869, %v875
  %v878 = vadd.f32 %v870, %v875
  %v879 = vadd.f32 %v871, %v875
  %v880 = vmax.f32 %v876, 0.0
  %v881 = vmax.f32 %v877, 0.0
  %v882 = vmax.f32 %v878, 0.0
  %v883 = vmax.f32 %v879, 0.0
  %v884 = vrot.slane %v880, 7
  %v885 = vrot.slane %v881, 7
  %v886 = vrot.slane %v882, 7
  %v887 = vrot.slane %v883, 7
  %v888 = vsel %vm360, %v886, %v887
  %v889 = vsel %vm360, %v885, %v886
  %v890 = vsel %vm360, %v884, %v885
  %v891 = vsel %vm360, %v887, %v884
  %v892 = vsel %vm344, 0.0, %v891
  %v893 = vsel %vm345, 0.0, %v890
  %v894 = vsel %vm346, 0.0, %v889
  %v895 = vsel %vm347, 0.0, %v888
  %v896 = vrot.slane %v880, 1
  %v897 = vrot.slane %v881, 1
  %v898 = vrot.slane %v882, 1
  %v899 = vrot.slane %v883, 1
  %v900 = vsel %vm373, %v898, %v899
  %v901 = vsel %vm373, %v897, %v898
  %v902 = vsel %vm373, %v896, %v897
  %v903 = vsel %vm373, %v899, %v896
  %v904 = vsel %vm348, 0.0, %v902
  %v905 = vsel %vm349, 0.0, %v901
  %v906 = vsel %vm350, 0.0, %v900
  %v907 = vsel %vm351, 0.0, %v903
  %v908 = vpack.c.bf16 %v893, %v892
  %v909 = vpack.c.bf16 %v881, %v880
  %v910 = vpack.c.bf16 %v905, %v904
  %v911 = vpack.c.bf16 %v895, %v894
  %v912 = vpack.c.bf16 %v883, %v882
  %v913 = vpack.c.bf16 %v907, %v906
  %v914 = vld [vmem:[%s2] sm:$0xf]
  %v915 = vld [vmem:[%s2 + $0x4] sm:$0xf]
  %v916 = vld [vmem:[%s2 + $0x8] sm:$0xf]
  %v917 = vld [vmem:[%s2 + $0xc] sm:$0xf]
  %v918 = vld [vmem:[%s2 + $0x10] sm:$0xf]
  %v919 = vld [vmem:[%s2 + $0x14] sm:$0xf]
  %v920 = vld [vmem:[%s2 + $0x18] sm:$0xf]
  %v921 = vld [vmem:[%s2 + $0x1c] sm:$0xf]
  %v922 = vld [vmem:[%s2 + $0x20] sm:$0xf]
  %v923 = vld [vmem:[%s2 + $0x24] sm:$0xf]
  %v924 = vld [vmem:[%s2 + $0x28] sm:$0xf]
  %v925 = vld [vmem:[%s2 + $0x2c] sm:$0xf]
  %v926 = vld [vmem:[%s2 + $0x30] sm:$0xf]
  %v927 = vld [vmem:[%s2 + $0x34] sm:$0xf]
  %v928 = vld [vmem:[%s2 + $0x38] sm:$0xf]
  %v929 = vld [vmem:[%s2 + $0x3c] sm:$0xf]
  %v930 = vld [vmem:[%s2 + $0x40] sm:$0xf]
  %v931 = vld [vmem:[%s2 + $0x44] sm:$0xf]
  %v932 = vld [vmem:[%s2 + $0x48] sm:$0xf]
  %v933 = vld [vmem:[%s2 + $0x4c] sm:$0xf]
  %v934 = vld [vmem:[%s2 + $0x50] sm:$0xf]
  %v935 = vld [vmem:[%s2 + $0x54] sm:$0xf]
  %v936 = vld [vmem:[%s2 + $0x58] sm:$0xf]
  %v937 = vld [vmem:[%s2 + $0x5c] sm:$0xf]
  %v938 = vld [vmem:[%s2 + $0x60] sm:$0xf]
  %v939 = vld [vmem:[%s2 + $0x64] sm:$0xf]
  %v940 = vld [vmem:[%s2 + $0x68] sm:$0xf]
  %v941 = vld [vmem:[%s2 + $0x6c] sm:$0xf]
  %v942 = vld [vmem:[%s2 + $0x70] sm:$0xf]
  %v943 = vld [vmem:[%s2 + $0x74] sm:$0xf]
  %v944 = vld [vmem:[%s2 + $0x78] sm:$0xf]
  %v945 = vld [vmem:[%s2 + $0x7c] sm:$0xf]
  %v946 = vld [vmem:[%s2 + $0x80] sm:$0xf]
  %v947 = vld [vmem:[%s2 + $0x84] sm:$0xf]
  %v948 = vld [vmem:[%s2 + $0x88] sm:$0xf]
  %v949 = vld [vmem:[%s2 + $0x8c] sm:$0xf]
  %v950 = vld [vmem:[%s2 + $0x90] sm:$0xf]
  %v951 = vld [vmem:[%s2 + $0x94] sm:$0xf]
  %v952 = vld [vmem:[%s2 + $0x98] sm:$0xf]
  %v953 = vld [vmem:[%s2 + $0x9c] sm:$0xf]
  %v954 = vld [vmem:[%s2 + $0xa0] sm:$0xf]
  %v955 = vld [vmem:[%s2 + $0xa4] sm:$0xf]
  %v956 = vld [vmem:[%s2 + $0xa8] sm:$0xf]
  %v957 = vld [vmem:[%s2 + $0xac] sm:$0xf]
  %v958 = vld [vmem:[%s2 + $0xb0] sm:$0xf]
  %v959 = vld [vmem:[%s2 + $0xb4] sm:$0xf]
  %v960 = vld [vmem:[%s2 + $0xb8] sm:$0xf]
  %v961 = vld [vmem:[%s2 + $0xbc] sm:$0xf]
  %v1010 = vunpack.c.l.b16 %v914
  %v1011 = vunpack.c.l.b16 %v915
  %v1012 = vunpack.c.l.b16 %v916
  %v1013 = vunpack.c.l.b16 %v917
  %v1014 = vunpack.c.l.b16 %v918
  %v1015 = vunpack.c.l.b16 %v919
  %v1016 = vunpack.c.l.b16 %v920
  %v1017 = vunpack.c.l.b16 %v921
  %v1018 = vunpack.c.l.b16 %v922
  %v1019 = vunpack.c.l.b16 %v923
  %v1020 = vunpack.c.l.b16 %v924
  %v1021 = vunpack.c.l.b16 %v925
  %v1022 = vunpack.c.l.b16 %v926
  %v1023 = vunpack.c.l.b16 %v927
  %v1024 = vunpack.c.l.b16 %v928
  %v1025 = vunpack.c.l.b16 %v929
  %v1026 = vunpack.c.l.b16 %v930
  %v1027 = vunpack.c.l.b16 %v931
  %v1028 = vunpack.c.l.b16 %v932
  %v1029 = vunpack.c.l.b16 %v933
  %v1030 = vunpack.c.l.b16 %v934
  %v1031 = vunpack.c.l.b16 %v935
  %v1032 = vunpack.c.l.b16 %v936
  %v1033 = vunpack.c.l.b16 %v937
  %v1034 = vunpack.c.l.b16 %v938
  %v1035 = vunpack.c.l.b16 %v939
  %v1036 = vunpack.c.l.b16 %v940
  %v1037 = vunpack.c.l.b16 %v941
  %v1038 = vunpack.c.l.b16 %v942
  %v1039 = vunpack.c.l.b16 %v943
  %v1040 = vunpack.c.l.b16 %v944
  %v1041 = vunpack.c.l.b16 %v945
  %v1042 = vunpack.c.l.b16 %v946
  %v1043 = vunpack.c.l.b16 %v947
  %v1044 = vunpack.c.l.b16 %v948
  %v1045 = vunpack.c.l.b16 %v949
  %v1046 = vunpack.c.l.b16 %v950
  %v1047 = vunpack.c.l.b16 %v951
  %v1048 = vunpack.c.l.b16 %v952
  %v1049 = vunpack.c.l.b16 %v953
  %v1050 = vunpack.c.l.b16 %v954
  %v1051 = vunpack.c.l.b16 %v955
  %v1052 = vunpack.c.l.b16 %v956
  %v1053 = vunpack.c.l.b16 %v957
  %v1054 = vunpack.c.l.b16 %v958
  %v1055 = vunpack.c.l.b16 %v959
  %v1056 = vunpack.c.l.b16 %v960
  %v1057 = vunpack.c.l.b16 %v961
  %v1058 = vpack.c.b16 %v1011, %v1010
  %v1059 = vpack.c.b16 %v1013, %v1012
  %v1060 = vpack.c.b16 %v1015, %v1014
  %v1061 = vpack.c.b16 %v1017, %v1016
  %v1062 = vpack.c.b16 %v1019, %v1018
  %v1063 = vpack.c.b16 %v1021, %v1020
  %v1064 = vpack.c.b16 %v1023, %v1022
  %v1065 = vpack.c.b16 %v1025, %v1024
  %v1066 = vpack.c.b16 %v1027, %v1026
  %v1067 = vpack.c.b16 %v1029, %v1028
  %v1068 = vpack.c.b16 %v1031, %v1030
  %v1069 = vpack.c.b16 %v1033, %v1032
  %v1070 = vpack.c.b16 %v1035, %v1034
  %v1071 = vpack.c.b16 %v1037, %v1036
  %v1072 = vpack.c.b16 %v1039, %v1038
  %v1073 = vpack.c.b16 %v1041, %v1040
  %v1074 = vpack.c.b16 %v1043, %v1042
  %v1075 = vpack.c.b16 %v1045, %v1044
  %v1076 = vpack.c.b16 %v1047, %v1046
  %v1077 = vpack.c.b16 %v1049, %v1048
  %v1078 = vpack.c.b16 %v1051, %v1050
  %v1079 = vpack.c.b16 %v1053, %v1052
  %v1080 = vpack.c.b16 %v1055, %v1054
  %v1081 = vpack.c.b16 %v1057, %v1056
  %1106 = vmatprep.subr.bf16.mxu0 0
  %1107 = vmatpush1.bf16.msra.mxu0 %v1058
  %1108 = vmatprep.subr.bf16.mxu0 0
  %1109 = vmatpush1.bf16.msra.mxu0 %v1059
  %1110 = vmatprep.subr.bf16.mxu0 0
  %1111 = vmatpush1.bf16.msra.mxu0 %v1060
  %1112 = vmatprep.subr.bf16.mxu0 0
  %1113 = vmatpush1.bf16.msra.mxu0 %v1061
  %1114 = vmatprep.subr.bf16.mxu0 0
  %1115 = vmatpush1.bf16.msra.mxu0 %v1062
  %1116 = vmatprep.subr.bf16.mxu0 0
  %1117 = vmatpush1.bf16.msra.mxu0 %v1063
  %1118 = vmatprep.subr.bf16.mxu0 0
  %1119 = vmatpush1.bf16.msra.mxu0 %v1064
  %1120 = vmatprep.subr.bf16.mxu0 0
  %1121 = vmatpush1.bf16.msra.mxu0 %v1065
  %1122 = vmatprep.subr.bf16.mxu0 0
  %1123 = vmatpush1.bf16.msra.mxu0 %v1066
  %1124 = vmatprep.subr.bf16.mxu0 0
  %1125 = vmatpush1.bf16.msra.mxu0 %v1067
  %1126 = vmatprep.subr.bf16.mxu0 0
  %1127 = vmatpush1.bf16.msra.mxu0 %v1068
  %1128 = vmatprep.subr.bf16.mxu0 0
  %1129 = vmatpush1.bf16.msra.mxu0 %v1069
  %1130 = vmatprep.subr.bf16.mxu0 0
  %1131 = vmatpush1.bf16.msra.mxu0 %v1070
  %1132 = vmatprep.subr.bf16.mxu0 0
  %1133 = vmatpush1.bf16.msra.mxu0 %v1071
  %1134 = vmatprep.subr.bf16.mxu0 0
  %1135 = vmatpush1.bf16.msra.mxu0 %v1072
  %1136 = vmatprep.subr.bf16.mxu0 0
  %1137 = vmatpush1.bf16.msra.mxu0 %v1073
  %1138 = vmatprep.mubr.bf16.mxu0 %v909
  %1139 = vmatmul.mubr.bf16.gmra.mrb[0].mxu0 %v908
  %v1140 = vpop.f32.mrb[0].mxu0
  %v1141 = vadd.f32 0.0, %v1140
  %v1142 = vpop.f32.mrb[0].mxu0
  %v1143 = vpop.f32.mrb[0].mxu0
  %v1144 = vadd.f32 0.0, %v1143
  %v1145 = vpop.f32.mrb[0].mxu0
  %1146 = vmatprep.mubr.bf16.mxu0 %v912
  %1147 = vmatmul.mubr.bf16.gmra.mrb[0].mxu0 %v911
  %v1148 = vpop.f32.mrb[0].mxu0
  %v1149 = vadd.f32 0.0, %v1148
  %v1150 = vpop.f32.mrb[0].mxu0
  %v1151 = vpop.f32.mrb[0].mxu0
  %v1152 = vadd.f32 0.0, %v1151
  %v1153 = vpop.f32.mrb[0].mxu0
  %1154 = vdwg.mxu0
  %1155 = vmatprep.subr.bf16.mxu0 0
  %1156 = vmatpush1.bf16.msra.mxu0 %v1074
  %1157 = vmatprep.subr.bf16.mxu0 0
  %1158 = vmatpush1.bf16.msra.mxu0 %v1075
  %1159 = vmatprep.subr.bf16.mxu0 0
  %1160 = vmatpush1.bf16.msra.mxu0 %v1076
  %1161 = vmatprep.subr.bf16.mxu0 0
  %1162 = vmatpush1.bf16.msra.mxu0 %v1077
  %1163 = vmatprep.subr.bf16.mxu0 0
  %1164 = vmatpush1.bf16.msra.mxu0 %v1078
  %1165 = vmatprep.subr.bf16.mxu0 0
  %1166 = vmatpush1.bf16.msra.mxu0 %v1079
  %1167 = vmatprep.subr.bf16.mxu0 0
  %1168 = vmatpush1.bf16.msra.mxu0 %v1080
  %1169 = vmatprep.subr.bf16.mxu0 0
  %1170 = vmatpush1.bf16.msra.mxu0 %v1081
  %1171 = vmatprep.subr.bf16.mxu0 0
  %1172 = vmatpush1.bf16.msra.mxu0 0
  %1173 = vmatprep.subr.bf16.mxu0 0
  %1174 = vmatpush1.bf16.msra.mxu0 0
  %1175 = vmatprep.subr.bf16.mxu0 0
  %1176 = vmatpush1.bf16.msra.mxu0 0
  %1177 = vmatprep.subr.bf16.mxu0 0
  %1178 = vmatpush1.bf16.msra.mxu0 0
  %1179 = vmatprep.subr.bf16.mxu0 0
  %1180 = vmatpush1.bf16.msra.mxu0 0
  %1181 = vmatprep.subr.bf16.mxu0 0
  %1182 = vmatpush1.bf16.msra.mxu0 0
  %1183 = vmatprep.subr.bf16.mxu0 0
  %1184 = vmatpush1.bf16.msra.mxu0 0
  %1185 = vmatprep.subr.bf16.mxu0 0
  %1186 = vmatpush1.bf16.msra.mxu0 0
  %1187 = vmatprep.mubr.bf16.mxu0 0
  %1188 = vmatmul.mubr.bf16.gmra.mrb[0].mxu0 %v910
  %v1189 = vpop.f32.mrb[0].mxu0
  %v1190 = vadd.f32 %v1141, %v1189
  %v1191 = vpop.f32.mrb[0].mxu0
  %v1192 = vpop.f32.mrb[0].mxu0
  %v1193 = vadd.f32 %v1144, %v1192
  %v1194 = vpop.f32.mrb[0].mxu0
  %1195 = vmatprep.mubr.bf16.mxu0 0
  %1196 = vmatmul.mubr.bf16.gmra.mrb[0].mxu0 %v913
  %v1197 = vpop.f32.mrb[0].mxu0
  %v1198 = vadd.f32 %v1149, %v1197
  %v1199 = vpop.f32.mrb[0].mxu0
  %v1200 = vpop.f32.mrb[0].mxu0
  %v1201 = vadd.f32 %v1152, %v1200
  %v1202 = vpop.f32.mrb[0].mxu0
  %1203 = vdwg.mxu0
  %v1204 = vadd.f32 %v1190, %v1193
  %v1205 = vadd.f32 %v1204, %v1198
  %v1206 = vadd.f32 %v1205, %v1201
  %v1207 = vrot.slane %v1206, 4
  %v1208 = vadd.f32 %v1206, %v1207
  %v1209 = vrot.slane %v1208, 2
  %v1210 = vadd.f32 %v1208, %v1209
  %v1211 = vrot.slane %v1210, 1
  %v1212 = vadd.f32 %v1210, %v1211
  %v1213 = vmul.f32 %v1190, %v1190
  %v1214 = vmul.f32 %v1193, %v1193
  %v1215 = vmul.f32 %v1198, %v1198
  %v1216 = vmul.f32 %v1201, %v1201
  %v1217 = vadd.f32 %v1213, %v1214
  %v1218 = vadd.f32 %v1217, %v1215
  %v1219 = vadd.f32 %v1218, %v1216
  %v1220 = vrot.slane %v1219, 4
  %v1221 = vadd.f32 %v1219, %v1220
  %v1222 = vrot.slane %v1221, 2
  %v1223 = vadd.f32 %v1221, %v1222
  %v1224 = vrot.slane %v1223, 1
  %v1225 = vadd.f32 %v1223, %v1224
  %v1226 = vsel %vm700, %v1212, %v1225
  %1227 = vmatprep.subr.mxu0 0.0
  %1228 = vmatpush1.msra.mxu0 %v265
  %1229 = vmatprep.subr.mxu0 0.0
  %1230 = vmatpush1.msra.mxu0 %v266
  %1231 = vmatprep.subr.mxu0 0.0
  %1232 = vmatpush1.msra.mxu0 %v267
  %1233 = vmatprep.subr.mxu0 0.0
  %1234 = vmatpush1.msra.mxu0 %v268
  %1235 = vmatprep.subr.mxu0 0.0
  %1236 = vmatpush1.msra.mxu0 %v269
  %1237 = vmatprep.subr.mxu0 0.0
  %1238 = vmatpush1.msra.mxu0 %v270
  %1239 = vmatprep.subr.mxu0 0.0
  %1240 = vmatpush1.msra.mxu0 %v271
  %1241 = vmatprep.subr.mxu0 0.0
  %1242 = vmatpush1.msra.mxu0 %v272
  %1243 = vmatprep.subr.mxu0 0.0
  %1244 = vmatpush1.msra.mxu0 %v273
  %1245 = vmatprep.subr.mxu0 0.0
  %1246 = vmatpush1.msra.mxu0 %v274
  %1247 = vmatprep.subr.mxu0 0.0
  %1248 = vmatpush1.msra.mxu0 %v275
  %1249 = vmatprep.subr.mxu0 0.0
  %1250 = vmatpush1.msra.mxu0 %v276
  %1251 = vmatprep.subr.mxu0 0.0
  %1252 = vmatpush1.msra.mxu0 %v277
  %1253 = vmatprep.subr.mxu0 0.0
  %1254 = vmatpush1.msra.mxu0 %v278
  %1255 = vmatprep.subr.mxu0 0.0
  %1256 = vmatpush1.msra.mxu0 %v279
  %1257 = vmatprep.subr.mxu0 0.0
  %1258 = vmatpush1.msra.mxu0 %v280
  %1259 = vmatprep.subr.mxu0 0.0
  %1260 = vmatpush1.msra.mxu0 0.0
  %1261 = vmatprep.subr.mxu0 0.0
  %1262 = vmatpush1.msra.mxu0 0.0
  %1263 = vmatprep.subr.mxu0 0.0
  %1264 = vmatpush1.msra.mxu0 0.0
  %1265 = vmatprep.subr.mxu0 0.0
  %1266 = vmatpush1.msra.mxu0 0.0
  %1267 = vmatprep.subr.mxu0 0.0
  %1268 = vmatpush1.msra.mxu0 0.0
  %1269 = vmatprep.subr.mxu0 0.0
  %1270 = vmatpush1.msra.mxu0 0.0
  %1271 = vmatprep.subr.mxu0 0.0
  %1272 = vmatpush1.msra.mxu0 0.0
  %1273 = vmatprep.subr.mxu0 0.0
  %1274 = vmatpush1.msra.mxu0 0.0
  %1275 = vmatprep.subr.mxu0 0.0
  %1276 = vmatpush1.msra.mxu0 0.0
  %1277 = vmatprep.subr.mxu0 0.0
  %1278 = vmatpush1.msra.mxu0 0.0
  %1279 = vmatprep.subr.mxu0 0.0
  %1280 = vmatpush1.msra.mxu0 0.0
  %1281 = vmatprep.subr.mxu0 0.0
  %1282 = vmatpush1.msra.mxu0 0.0
  %1283 = vmatprep.subr.mxu0 0.0
  %1284 = vmatpush1.msra.mxu0 0.0
  %1285 = vmatprep.subr.mxu0 0.0
  %1286 = vmatpush1.msra.mxu0 0.0
  %1287 = vmatprep.subr.mxu0 0.0
  %1288 = vmatpush1.msra.mxu0 0.0
  %1289 = vmatprep.subr.mxu0 0.0
  %1290 = vmatpush1.msra.mxu0 0.0
  %1291 = vmatprep.mubr.f32.mxu0 0.0
  %1292 = vmatmul.mubr.f32.gmra.mrb[0].mxu0 %v1226
  %v1293 = vpop.f32.mrb[0].mxu0
  %v1294 = vadd.f32 0.0, %v1293
  %v1295 = vpop.f32.mrb[0].mxu0
  %1296 = vdwg.mxu0
  %v1297 = vmul.f32 %v1294, 0.001953125
  %v1298 = vmul.f32 %v1297, %v1297
  %v1300 = vrot.slane %v1298, 7
  %v1302 = vsub.f32 %v1297, %v1300
  %v1303 = vadd.f32 %v1302, 1e-05
  %v1304 = vrsqrt.pop %v1303
  %v1306 = vrot.slane %v1304, 1
  %v1308 = vmul.f32 %v354, %v1306
  %v1309 = vmul.f32 %v1297, %v1308
  %v1310 = vsub.f32 %v355, %v1309
  %v1312 = vrot.slane %v1310, 7
  %v1314 = vsel %vm700, %v1308, %v1312
  %v1316 = vsel %vm790, %v1314, 0
  %1318 = vmatprep.subr.mxu0 0.0
  %1319 = vmatpush1.msra.mxu0 %v295
  %1320 = vmatprep.subr.mxu0 0.0
  %1321 = vmatpush1.msra.mxu0 0.0
  %1322 = vmatprep.subr.mxu0 0.0
  %1323 = vmatpush1.msra.mxu0 0.0
  %1324 = vmatprep.subr.mxu0 0.0
  %1325 = vmatpush1.msra.mxu0 0.0
  %1326 = vmatprep.subr.mxu0 0.0
  %1327 = vmatpush1.msra.mxu0 0.0
  %1328 = vmatprep.subr.mxu0 0.0
  %1329 = vmatpush1.msra.mxu0 0.0
  %1330 = vmatprep.subr.mxu0 0.0
  %1331 = vmatpush1.msra.mxu0 0.0
  %1332 = vmatprep.subr.mxu0 0.0
  %1333 = vmatpush1.msra.mxu0 0.0
  %1334 = vmatprep.subr.mxu0 0.0
  %1335 = vmatpush1.msra.mxu0 0.0
  %1336 = vmatprep.subr.mxu0 0.0
  %1337 = vmatpush1.msra.mxu0 0.0
  %1338 = vmatprep.subr.mxu0 0.0
  %1339 = vmatpush1.msra.mxu0 0.0
  %1340 = vmatprep.subr.mxu0 0.0
  %1341 = vmatpush1.msra.mxu0 0.0
  %1342 = vmatprep.subr.mxu0 0.0
  %1343 = vmatpush1.msra.mxu0 0.0
  %1344 = vmatprep.subr.mxu0 0.0
  %1345 = vmatpush1.msra.mxu0 0.0
  %1346 = vmatprep.subr.mxu0 0.0
  %1347 = vmatpush1.msra.mxu0 0.0
  %1348 = vmatprep.subr.mxu0 0.0
  %1349 = vmatpush1.msra.mxu0 0.0
  %1350 = vmatprep.subr.mxu0 0.0
  %1351 = vmatpush1.msra.mxu0 0.0
  %1352 = vmatprep.subr.mxu0 0.0
  %1353 = vmatpush1.msra.mxu0 0.0
  %1354 = vmatprep.subr.mxu0 0.0
  %1355 = vmatpush1.msra.mxu0 0.0
  %1356 = vmatprep.subr.mxu0 0.0
  %1357 = vmatpush1.msra.mxu0 0.0
  %1358 = vmatprep.subr.mxu0 0.0
  %1359 = vmatpush1.msra.mxu0 0.0
  %1360 = vmatprep.subr.mxu0 0.0
  %1361 = vmatpush1.msra.mxu0 0.0
  %1362 = vmatprep.subr.mxu0 0.0
  %1363 = vmatpush1.msra.mxu0 0.0
  %1364 = vmatprep.subr.mxu0 0.0
  %1365 = vmatpush1.msra.mxu0 0.0
  %1366 = vmatprep.subr.mxu0 0.0
  %1367 = vmatpush1.msra.mxu0 0.0
  %1368 = vmatprep.subr.mxu0 0.0
  %1369 = vmatpush1.msra.mxu0 0.0
  %1370 = vmatprep.subr.mxu0 0.0
  %1371 = vmatpush1.msra.mxu0 0.0
  %1372 = vmatprep.subr.mxu0 0.0
  %1373 = vmatpush1.msra.mxu0 0.0
  %1374 = vmatprep.subr.mxu0 0.0
  %1375 = vmatpush1.msra.mxu0 0.0
  %1376 = vmatprep.subr.mxu0 0.0
  %1377 = vmatpush1.msra.mxu0 0.0
  %1378 = vmatprep.subr.mxu0 0.0
  %1379 = vmatpush1.msra.mxu0 0.0
  %1380 = vmatprep.subr.mxu0 0.0
  %1381 = vmatpush1.msra.mxu0 0.0
  %1382 = vmatprep.mubr.f32.mxu0 0.0
  %1383 = vmatmul.mubr.f32.gmra.mrb[0].mxu0 %v1316
  %v1384 = vpop.f32.mrb[0].mxu0
  %v1385 = vadd.f32 0.0, %v1384
  %v1386 = vpop.f32.mrb[0].mxu0
  %1387 = vdwg.mxu0
  %v1388 = vlaneseq
  %v1389 = vshrl.u32 %v1388, 7
  %v1390 = vsub.s32 0, %v1389
  %v1391 = vrot.slane %v1385, %v1390
  %v1392 = vmul.f32 %v1190, %v1391
  %v1393 = vmul.f32 %v1193, %v1391
  %v1394 = vmul.f32 %v1198, %v1391
  %v1395 = vmul.f32 %v1201, %v1391
  %v1396 = vlaneseq
  %v1397 = vshrl.u32 %v1396, 7
  %v1398 = vsub.s32 1, %v1397
  %v1399 = vrot.slane %v1385, %v1398
  %v1400 = vadd.f32 %v1392, %v1399
  %v1401 = vadd.f32 %v1393, %v1399
  %v1402 = vadd.f32 %v1394, %v1399
  %v1403 = vadd.f32 %v1395, %v1399
  %v1404 = vadd.f32 %v1400, %v18
  %v1405 = vadd.f32 %v1401, %v19
  %v1406 = vadd.f32 %v1402, %v20
  %v1407 = vadd.f32 %v1403, %v21
  %v1408 = vmax.f32 %v1404, 0.0
  %v1409 = vmax.f32 %v1405, 0.0
  %v1410 = vmax.f32 %v1406, 0.0
  %v1411 = vmax.f32 %v1407, 0.0
  %1412 = vst [vmem:[%s4] sm:$0xff] %v1408
  %1413 = vst [vmem:[%s4 + $0x8] sm:$0xff] %v1409
  %1414 = vst [vmem:[%s4 + $0x10] sm:$0xff] %v1410
  %1415 = vst [vmem:[%s4 + $0x18] sm:$0xff] %v1411
  // Predicated region
  $region18: #{residual_block_pallas.1} parent=0 // pred_check
    _
  $region19: #{residual_block_pallas.1} parent=0 // pred_check_branch
    %1417 = sbr.rel (0) target = $region21
  $region20: #{residual_block_pallas.1} parent=0 // pred_region
    _
  $region21: #{residual_block_pallas.1} parent=0 // pred_fallthru
    _
  // Predicated region
  $region22: #{residual_block_pallas.1} parent=0 // pred_check
    _
  $region23: #{residual_block_pallas.1} parent=0 // pred_check_branch
    %1419 = sbr.rel (0) target = $region25
  $region24: #{residual_block_pallas.1} parent=0 // pred_region
    _
  $region25: #{residual_block_pallas.1} parent=0 // pred_fallthru
    _

</llo_original>
